<compile_context>
chip_gen: v7x
topology: tpu7x:2x2x1
jax: 0.10.0
libtpu: 0.0.40
codegen_flags: <defaults>
</compile_context>

<pallas_src>
import functools

import jax
import jax.numpy as jnp
import numpy as np
from jax.experimental import pallas as pl
from jax.experimental.pallas import tpu as pltpu


# ---------------------------------------------------------------------------
# Pallas kernel: fully fused self-attention for one (batch, query-tile) step.
# ---------------------------------------------------------------------------
def _self_attn_kernel(x_ref, wq_ref, bq_ref, wk_ref, bk_ref, wv_ref, bv_ref,
                      gamma_ref, out_ref, attn_ref, k_sc, v_sc, *, tq):
    i = pl.program_id(1)

    # Key / value projections for the whole batch element are computed once on
    # the first query tile and kept resident in VMEM scratch (bf16 MXU operands)
    # for every remaining query tile of this batch element.
    @pl.when(i == 0)
    def _():
        x_bf = x_ref[...].astype(jnp.bfloat16)                          # (N, C)
        k = jnp.dot(x_bf, wk_ref[...].astype(jnp.bfloat16),
                    preferred_element_type=jnp.float32) + bk_ref[...]   # (N, Cq)
        v = jnp.dot(x_bf, wv_ref[...].astype(jnp.bfloat16),
                    preferred_element_type=jnp.float32) + bv_ref[...]   # (N, C)
        k_sc[...] = k.astype(jnp.bfloat16)
        v_sc[...] = v.astype(jnp.bfloat16)

    # Query rows of this tile (also the residual input).
    q_start = pl.multiple_of(i * tq, tq)
    xq = x_ref[pl.ds(q_start, tq), :]                                   # (tq, C) f32

    q = jnp.dot(xq.astype(jnp.bfloat16), wq_ref[...].astype(jnp.bfloat16),
                preferred_element_type=jnp.float32) + bq_ref[...]       # (tq, Cq)

    # energy[m, n] = sum_c q[m, c] * k[n, c]   (== proj_query @ proj_key)
    energy = jax.lax.dot_general(
        q.astype(jnp.bfloat16), k_sc[...],
        dimension_numbers=(((1,), (1,)), ((), ())),
        preferred_element_type=jnp.float32)                             # (tq, N)

    # Softmax over keys (f32, numerically stable).
    m = jnp.max(energy, axis=-1, keepdims=True)
    p = jnp.exp(energy - m)
    denom = jnp.sum(p, axis=-1, keepdims=True)
    attn = p * pl.reciprocal(denom, approx=True)                        # (tq, N)

    # context[m, c] = sum_n attn[m, n] * v[n, c]
    ctx = jnp.dot(attn.astype(jnp.bfloat16), v_sc[...],
                  preferred_element_type=jnp.float32)                   # (tq, C)

    out_ref[...] = (gamma_ref[0] * ctx + xq).astype(out_ref.dtype)
    attn_ref[...] = attn.astype(attn_ref.dtype)


def pallas_self_attn(x_nc, wq, bq, wk, bk, wv, bv, gamma):
    """x_nc: (B, N, C) channels-last flattened features.
    Returns (out (B, N, C), attention (B, N, N))."""
    B, N, C = x_nc.shape
    Cq = wq.shape[1]

    # Query tile: biggest of {512, 256, 128} that divides N; otherwise the whole
    # row block (blocks equal to the full dim always satisfy the (8,128) rule).
    tq = N
    for cand in (512, 256, 128):
        if N % cand == 0:
            tq = cand
            break
    grid = (B, N // tq)

    kernel = functools.partial(_self_attn_kernel, tq=tq)

    out, attn = pl.pallas_call(
        kernel,
        grid=grid,
        in_specs=[
            pl.BlockSpec((None, N, C), lambda b, i: (b, 0, 0)),     # x (whole batch element)
            pl.BlockSpec((C, Cq), lambda b, i: (0, 0)),             # wq
            pl.BlockSpec((1, Cq), lambda b, i: (0, 0)),             # bq
            pl.BlockSpec((C, Cq), lambda b, i: (0, 0)),             # wk
            pl.BlockSpec((1, Cq), lambda b, i: (0, 0)),             # bk
            pl.BlockSpec((C, C), lambda b, i: (0, 0)),              # wv
            pl.BlockSpec((1, C), lambda b, i: (0, 0)),              # bv
            pl.BlockSpec(memory_space=pltpu.MemorySpace.SMEM),      # gamma (1,) scalar
        ],
        out_specs=[
            pl.BlockSpec((None, tq, C), lambda b, i: (b, i, 0)),    # out
            pl.BlockSpec((None, tq, N), lambda b, i: (b, i, 0)),    # attention (lane-dense)
        ],
        out_shape=[
            jax.ShapeDtypeStruct((B, N, C), jnp.float32),
            jax.ShapeDtypeStruct((B, N, N), jnp.float32),
        ],
        scratch_shapes=[
            pltpu.VMEM((N, Cq), jnp.bfloat16),                      # resident keys
            pltpu.VMEM((N, C), jnp.bfloat16),                       # resident values
        ],
        compiler_params=pltpu.CompilerParams(
            dimension_semantics=("parallel", "arbitrary"),
        ),
    )(x_nc, wq, bq, wk, bk, wv, bv, gamma)
    return out, attn


# ---------------------------------------------------------------------------
# Public forward (NCHW in / NCHW + attention out), matching Self_Attn.forward.
# ---------------------------------------------------------------------------
def self_attn_forward(x_nchw, p):
    B, C, H, W = x_nchw.shape
    N = H * W
    cq = p["wq"].shape[0]
    # NCHW -> (B, N, C): same spatial flattening order as .view(B, C, W*H).
    x_nc = jnp.transpose(x_nchw.reshape(B, C, N), (0, 2, 1))
    wq = jnp.transpose(p["wq"].reshape(cq, C))                      # (C, Cq)
    wk = jnp.transpose(p["wk"].reshape(cq, C))
    wv = jnp.transpose(p["wv"].reshape(C, C))
    out_nc, attn = pallas_self_attn(
        x_nc, wq, p["bq"].reshape(1, cq), wk, p["bk"].reshape(1, cq),
        wv, p["bv"].reshape(1, C), p["gamma"])
    out = jnp.transpose(out_nc, (0, 2, 1)).reshape(B, C, H, W)
    return out, attn


# ---------------------------------------------------------------------------
# Parameters (deterministic, PyTorch Conv2d 1x1 layout) and pure-JAX reference.
# ---------------------------------------------------------------------------
def init_params(key, in_dim):
    cq = in_dim // 8
    ks = jax.random.split(key, 6)

    def conv_w(k, cout, cin):
        return jax.random.normal(k, (cout, cin, 1, 1), jnp.float32) / jnp.sqrt(cin)

    return {
        "wq": conv_w(ks[0], cq, in_dim),
        "bq": 0.05 * jax.random.normal(ks[1], (cq,), jnp.float32),
        "wk": conv_w(ks[2], cq, in_dim),
        "bk": 0.05 * jax.random.normal(ks[3], (cq,), jnp.float32),
        "wv": conv_w(ks[4], in_dim, in_dim),
        "bv": 0.05 * jax.random.normal(ks[5], (in_dim,), jnp.float32),
        # The PyTorch module initializes gamma to 0; a nonzero value is used here
        # so the attention branch actually contributes to the numerical check.
        "gamma": jnp.full((1,), 0.5, jnp.float32),
    }


def reference_self_attn(x_nchw, p):
    B, C, H, W = x_nchw.shape
    N = H * W
    cq = p["wq"].shape[0]
    xf = x_nchw.reshape(B, C, N)                                        # (B, C, N)
    wq = p["wq"].reshape(cq, C)
    wk = p["wk"].reshape(cq, C)
    wv = p["wv"].reshape(C, C)
    q = jnp.einsum("oc,bcn->bon", wq, xf) + p["bq"][None, :, None]      # (B, cq, N)
    k = jnp.einsum("oc,bcn->bon", wk, xf) + p["bk"][None, :, None]      # (B, cq, N)
    v = jnp.einsum("oc,bcn->bon", wv, xf) + p["bv"][None, :, None]      # (B, C, N)
    energy = jnp.einsum("bcm,bcn->bmn", q, k)                           # (B, N, N)
    attention = jax.nn.softmax(energy, axis=-1)
    out = jnp.einsum("bcn,bmn->bcm", v, attention)                      # (B, C, N)
    out = out.reshape(B, C, H, W)
    out = p["gamma"][0] * out + x_nchw
    return out, attention


# ---------------------------------------------------------------------------
if __name__ == "__main__":
    key = jax.random.PRNGKey(0)
    k_x, k_p = jax.random.split(key)

    B, C, H, W = 2, 32, 16, 16            # in_dim=32 -> query/key channels = 4, N = 256
    x = jax.random.normal(k_x, (B, C, H, W), jnp.float32)
    params = init_params(k_p, in_dim=C)

    fwd = jax.jit(self_attn_forward)
    out, attn = fwd(x, params)
    jax.block_until_ready((out, attn))

    assert out.shape == (B, C, H, W), out.shape
    assert attn.shape == (B, H * W, H * W), attn.shape
    assert bool(jnp.all(jnp.isfinite(out))) and bool(jnp.all(jnp.isfinite(attn)))

    out_ref, attn_ref = reference_self_attn(x, params)
    np.testing.assert_allclose(np.asarray(attn), np.asarray(attn_ref), rtol=2e-2, atol=2e-2)
    np.testing.assert_allclose(np.asarray(out), np.asarray(out_ref), rtol=2e-2, atol=2e-2)

    print("KERNEL_OK")
</pallas_src>

<mosaic_0001>
module attributes {stable_mosaic.version = 11 : i64} {
  func.func @_self_attn_kernel(%arg0: i32, %arg1: i32, %arg2: memref<1x256x32xf32, #tpu.memory_space<vmem>>, %arg3: memref<32x4xf32, #tpu.memory_space<vmem>>, %arg4: memref<1x4xf32, #tpu.memory_space<vmem>>, %arg5: memref<32x4xf32, #tpu.memory_space<vmem>>, %arg6: memref<1x4xf32, #tpu.memory_space<vmem>>, %arg7: memref<32x32xf32, #tpu.memory_space<vmem>>, %arg8: memref<1x32xf32, #tpu.memory_space<vmem>>, %arg9: memref<1xf32, #tpu.memory_space<smem>>, %arg10: memref<1x256x32xf32, #tpu.memory_space<vmem>>, %arg11: memref<1x256x256xf32, #tpu.memory_space<vmem>>, %arg12: memref<256x4xbf16, #tpu.memory_space<vmem>>, %arg13: memref<256x32xbf16, #tpu.memory_space<vmem>>) attributes {dimension_semantics = [#tpu.dimension_semantics<parallel>, #tpu.dimension_semantics<arbitrary>], iteration_bounds = array<i64: 2, 1>, scalar_prefetch = 0 : i64, scratch_operands = 2 : i64, tpu.core_type = #tpu.core_type<tc>, window_params = [{transform_indices = @transform_0, window_bounds = array<i64: 1, 256, 32>}, {pipeline_mode = #tpu.pipeline_mode<synchronous>, transform_indices = @transform_1, window_bounds = array<i64: 32, 4>}, {pipeline_mode = #tpu.pipeline_mode<synchronous>, transform_indices = @transform_2, window_bounds = array<i64: 1, 4>}, {pipeline_mode = #tpu.pipeline_mode<synchronous>, transform_indices = @transform_3, window_bounds = array<i64: 32, 4>}, {pipeline_mode = #tpu.pipeline_mode<synchronous>, transform_indices = @transform_4, window_bounds = array<i64: 1, 4>}, {pipeline_mode = #tpu.pipeline_mode<synchronous>, transform_indices = @transform_5, window_bounds = array<i64: 32, 32>}, {pipeline_mode = #tpu.pipeline_mode<synchronous>, transform_indices = @transform_6, window_bounds = array<i64: 1, 32>}, {transform_indices = @transform_7, window_bounds = array<i64: 1>}, {transform_indices = @transform_8, window_bounds = array<i64: 1, 256, 32>}, {transform_indices = @transform_9, window_bounds = array<i64: 1, 256, 256>}]} {
    %c0_i32 = arith.constant 0 : i32
    %0 = arith.cmpi eq, %arg1, %c0_i32 : i32
    %1 = arith.extui %0 : i1 to i32
    %c0_i32_0 = arith.constant 0 : i32
    %2 = arith.cmpi ne, %1, %c0_i32_0 : i32
    scf.if %2 {
      %c0_21 = arith.constant 0 : index
      %c0_22 = arith.constant 0 : index
      %c0_23 = arith.constant 0 : index
      %41 = vector.load %arg2[%c0_21, %c0_22, %c0_23] : memref<1x256x32xf32, #tpu.memory_space<vmem>>, vector<1x256x32xf32>
      %42 = vector.shape_cast %41 : vector<1x256x32xf32> to vector<256x32xf32>
      %43 = arith.truncf %42 : vector<256x32xf32> to vector<256x32xbf16>
      %c0_24 = arith.constant 0 : index
      %c0_25 = arith.constant 0 : index
      %44 = vector.load %arg5[%c0_24, %c0_25] : memref<32x4xf32, #tpu.memory_space<vmem>>, vector<32x4xf32>
      %45 = arith.truncf %44 : vector<32x4xf32> to vector<32x4xbf16>
      %cst_26 = arith.constant dense<0.000000e+00> : vector<256x4xf32>
      %46 = tpu.matmul %43, %45, %cst_26 {dimension_numbers = #tpu.dot_dimension_numbers<[1], [0], [0], [1], [0, 0, 1, 1], [], []>} : vector<256x32xbf16>, vector<32x4xbf16>, vector<256x4xf32> -> vector<256x4xf32>
      %c0_27 = arith.constant 0 : index
      %c0_28 = arith.constant 0 : index
      %47 = vector.load %arg6[%c0_27, %c0_28] : memref<1x4xf32, #tpu.memory_space<vmem>>, vector<1x4xf32>
      %48 = vector.broadcast %47 : vector<1x4xf32> to vector<256x4xf32>
      %49 = arith.addf %46, %48 : vector<256x4xf32>
      %c0_29 = arith.constant 0 : index
      %c0_30 = arith.constant 0 : index
      %50 = vector.load %arg7[%c0_29, %c0_30] : memref<32x32xf32, #tpu.memory_space<vmem>>, vector<32x32xf32>
      %51 = arith.truncf %50 : vector<32x32xf32> to vector<32x32xbf16>
      %cst_31 = arith.constant dense<0.000000e+00> : vector<256x32xf32>
      %52 = tpu.matmul %43, %51, %cst_31 {dimension_numbers = #tpu.dot_dimension_numbers<[1], [0], [0], [1], [0, 0, 1, 1], [], []>} : vector<256x32xbf16>, vector<32x32xbf16>, vector<256x32xf32> -> vector<256x32xf32>
      %c0_32 = arith.constant 0 : index
      %c0_33 = arith.constant 0 : index
      %53 = vector.load %arg8[%c0_32, %c0_33] : memref<1x32xf32, #tpu.memory_space<vmem>>, vector<1x32xf32>
      %54 = vector.broadcast %53 : vector<1x32xf32> to vector<256x32xf32>
      %55 = arith.addf %52, %54 : vector<256x32xf32>
      %56 = arith.truncf %49 : vector<256x4xf32> to vector<256x4xbf16>
      %c0_34 = arith.constant 0 : index
      %c0_35 = arith.constant 0 : index
      %57 = vector.load %arg12[%c0_34, %c0_35] : memref<256x4xbf16, #tpu.memory_space<vmem>>, vector<256x4xbf16>
      tpu.vector_store %arg12[%c0_34, %c0_35], %56 {strides = array<i32>} : memref<256x4xbf16, #tpu.memory_space<vmem>>, vector<256x4xbf16>,
      %58 = arith.truncf %55 : vector<256x32xf32> to vector<256x32xbf16>
      %c0_36 = arith.constant 0 : index
      %c0_37 = arith.constant 0 : index
      %59 = vector.load %arg13[%c0_36, %c0_37] : memref<256x32xbf16, #tpu.memory_space<vmem>>, vector<256x32xbf16>
      tpu.vector_store %arg13[%c0_36, %c0_37], %58 {strides = array<i32>} : memref<256x32xbf16, #tpu.memory_space<vmem>>, vector<256x32xbf16>,
    } else {
    }
    %c256_i32 = arith.constant 256 : i32
    %3 = arith.muli %arg1, %c256_i32 : i32
    %4 = tpu.assume_multiple %3, 256 : i32
    %c0 = arith.constant 0 : index
    %5 = arith.index_cast %4 : i32 to index
    %c0_1 = arith.constant 0 : index
    %6 = vector.load %arg2[%c0, %5, %c0_1] : memref<1x256x32xf32, #tpu.memory_space<vmem>>, vector<1x256x32xf32>
    %7 = vector.shape_cast %6 : vector<1x256x32xf32> to vector<256x32xf32>
    %8 = arith.truncf %7 : vector<256x32xf32> to vector<256x32xbf16>
    %c0_2 = arith.constant 0 : index
    %c0_3 = arith.constant 0 : index
    %9 = vector.load %arg3[%c0_2, %c0_3] : memref<32x4xf32, #tpu.memory_space<vmem>>, vector<32x4xf32>
    %10 = arith.truncf %9 : vector<32x4xf32> to vector<32x4xbf16>
    %cst = arith.constant dense<0.000000e+00> : vector<256x4xf32>
    %11 = tpu.matmul %8, %10, %cst {dimension_numbers = #tpu.dot_dimension_numbers<[1], [0], [0], [1], [0, 0, 1, 1], [], []>} : vector<256x32xbf16>, vector<32x4xbf16>, vector<256x4xf32> -> vector<256x4xf32>
    %c0_4 = arith.constant 0 : index
    %c0_5 = arith.constant 0 : index
    %12 = vector.load %arg4[%c0_4, %c0_5] : memref<1x4xf32, #tpu.memory_space<vmem>>, vector<1x4xf32>
    %13 = vector.broadcast %12 : vector<1x4xf32> to vector<256x4xf32>
    %14 = arith.addf %11, %13 : vector<256x4xf32>
    %15 = arith.truncf %14 : vector<256x4xf32> to vector<256x4xbf16>
    %c0_6 = arith.constant 0 : index
    %c0_7 = arith.constant 0 : index
    %16 = vector.load %arg12[%c0_6, %c0_7] : memref<256x4xbf16, #tpu.memory_space<vmem>>, vector<256x4xbf16>
    %cst_8 = arith.constant dense<0.000000e+00> : vector<256x256xf32>
    %17 = tpu.matmul %15, %16, %cst_8 {dimension_numbers = #tpu.dot_dimension_numbers<[1], [1], [0], [0], [0, 0, 1, 0], [], []>} : vector<256x4xbf16>, vector<256x4xbf16>, vector<256x256xf32> -> vector<256x256xf32>
    %cst_9 = arith.constant dense<0xFF800000> : vector<256xf32>
    %18 = vector.multi_reduction <maximumf>, %17, %cst_9 [1] : vector<256x256xf32> to vector<256xf32>
    %19 = vector.shape_cast %18 : vector<256xf32> to vector<256x1xf32>
    %20 = vector.broadcast %19 : vector<256x1xf32> to vector<256x256xf32>
    %21 = arith.subf %17, %20 : vector<256x256xf32>
    %22 = math.exp %21 : vector<256x256xf32>
    %cst_10 = arith.constant dense<0.000000e+00> : vector<256xf32>
    %23 = vector.multi_reduction <add>, %22, %cst_10 [1] : vector<256x256xf32> to vector<256xf32>
    %24 = vector.shape_cast %23 : vector<256xf32> to vector<256x1xf32>
    %25 = tpu.reciprocal %24 {approx = true} : vector<256x1xf32> -> vector<256x1xf32>
    %26 = vector.broadcast %25 : vector<256x1xf32> to vector<256x256xf32>
    %27 = arith.mulf %22, %26 : vector<256x256xf32>
    %28 = arith.truncf %27 : vector<256x256xf32> to vector<256x256xbf16>
    %c0_11 = arith.constant 0 : index
    %c0_12 = arith.constant 0 : index
    %29 = vector.load %arg13[%c0_11, %c0_12] : memref<256x32xbf16, #tpu.memory_space<vmem>>, vector<256x32xbf16>
    %cst_13 = arith.constant dense<0.000000e+00> : vector<256x32xf32>
    %30 = tpu.matmul %28, %29, %cst_13 {dimension_numbers = #tpu.dot_dimension_numbers<[1], [0], [0], [1], [0, 0, 1, 1], [], []>} : vector<256x256xbf16>, vector<256x32xbf16>, vector<256x32xf32> -> vector<256x32xf32>
    %c0_14 = arith.constant 0 : index
    %31 = memref.load %arg9[%c0_14] : memref<1xf32, #tpu.memory_space<smem>>
    %32 = vector.broadcast %31 : f32 to vector<256x32xf32>
    %33 = arith.mulf %32, %30 : vector<256x32xf32>
    %34 = arith.addf %33, %7 : vector<256x32xf32>
    %c0_15 = arith.constant 0 : index
    %c0_16 = arith.constant 0 : index
    %c0_17 = arith.constant 0 : index
    %35 = vector.load %arg10[%c0_15, %c0_16, %c0_17] : memref<1x256x32xf32, #tpu.memory_space<vmem>>, vector<1x256x32xf32>
    %36 = vector.shape_cast %35 : vector<1x256x32xf32> to vector<256x32xf32>
    %37 = vector.shape_cast %34 : vector<256x32xf32> to vector<1x256x32xf32>
    tpu.vector_store %arg10[%c0_15, %c0_16, %c0_17], %37 {strides = array<i32>} : memref<1x256x32xf32, #tpu.memory_space<vmem>>, vector<1x256x32xf32>,
    %c0_18 = arith.constant 0 : index
    %c0_19 = arith.constant 0 : index
    %c0_20 = arith.constant 0 : index
    %38 = vector.load %arg11[%c0_18, %c0_19, %c0_20] : memref<1x256x256xf32, #tpu.memory_space<vmem>>, vector<1x256x256xf32>
    %39 = vector.shape_cast %38 : vector<1x256x256xf32> to vector<256x256xf32>
    %40 = vector.shape_cast %27 : vector<256x256xf32> to vector<1x256x256xf32>
    tpu.vector_store %arg11[%c0_18, %c0_19, %c0_20], %40 {strides = array<i32>} : memref<1x256x256xf32, #tpu.memory_space<vmem>>, vector<1x256x256xf32>,
    return
  }
  func.func @transform_0(%arg0: i32, %arg1: i32) -> (i32, i32, i32) {
    %c0_i32 = arith.constant 0 : i32
    %c0_i32_0 = arith.constant 0 : i32
    %c0_i32_1 = arith.constant 0 : i32
    return %arg0, %c0_i32, %c0_i32_0 : i32, i32, i32
  }
  func.func @transform_1(%arg0: i32, %arg1: i32) -> (i32, i32) {
    %c0_i32 = arith.constant 0 : i32
    %c0_i32_0 = arith.constant 0 : i32
    %c0_i32_1 = arith.constant 0 : i32
    return %c0_i32, %c0_i32_0 : i32, i32
  }
  func.func @transform_2(%arg0: i32, %arg1: i32) -> (i32, i32) {
    %c0_i32 = arith.constant 0 : i32
    %c0_i32_0 = arith.constant 0 : i32
    %c0_i32_1 = arith.constant 0 : i32
    return %c0_i32, %c0_i32_0 : i32, i32
  }
  func.func @transform_3(%arg0: i32, %arg1: i32) -> (i32, i32) {
    %c0_i32 = arith.constant 0 : i32
    %c0_i32_0 = arith.constant 0 : i32
    %c0_i32_1 = arith.constant 0 : i32
    return %c0_i32, %c0_i32_0 : i32, i32
  }
  func.func @transform_4(%arg0: i32, %arg1: i32) -> (i32, i32) {
    %c0_i32 = arith.constant 0 : i32
    %c0_i32_0 = arith.constant 0 : i32
    %c0_i32_1 = arith.constant 0 : i32
    return %c0_i32, %c0_i32_0 : i32, i32
  }
  func.func @transform_5(%arg0: i32, %arg1: i32) -> (i32, i32) {
    %c0_i32 = arith.constant 0 : i32
    %c0_i32_0 = arith.constant 0 : i32
    %c0_i32_1 = arith.constant 0 : i32
    return %c0_i32, %c0_i32_0 : i32, i32
  }
  func.func @transform_6(%arg0: i32, %arg1: i32) -> (i32, i32) {
    %c0_i32 = arith.constant 0 : i32
    %c0_i32_0 = arith.constant 0 : i32
    %c0_i32_1 = arith.constant 0 : i32
    return %c0_i32, %c0_i32_0 : i32, i32
  }
  func.func @transform_7(%arg0: i32, %arg1: i32) -> i32 {
    %c0_i32 = arith.constant 0 : i32
    %c0_i32_0 = arith.constant 0 : i32
    return %c0_i32 : i32
  }
  func.func @transform_8(%arg0: i32, %arg1: i32) -> (i32, i32, i32) {
    %c0_i32 = arith.constant 0 : i32
    %c0_i32_0 = arith.constant 0 : i32
    return %arg0, %arg1, %c0_i32 : i32, i32, i32
  }
  func.func @transform_9(%arg0: i32, %arg1: i32) -> (i32, i32, i32) {
    %c0_i32 = arith.constant 0 : i32
    %c0_i32_0 = arith.constant 0 : i32
    return %arg0, %arg1, %c0_i32 : i32, i32, i32
  }
}

</mosaic_0001>

<llo_original>
// kernel: self_attn_forward.1
$region0: #{self_attn_forward.1}
  #allocation0 [shape = 'u32[]', space=smem, size = 0x4, offset = 0x4, fixed_abs, tag = 'smem constant byte address 0x4 - core index']
  #allocation1 [shape = 'u32[144,128]{1,0:T(1,128)}', space=vmem, size = 0x12000, scoped, tag = 'internal scratch']
  #allocation2 [shape = 'bf16[256,4]{1,0:T(16,128)(2,1)}', space=vmem, size = 0x10000, scoped, tag = 'scratch operand']
  #allocation3 [shape = 'bf16[256,32]{1,0:T(16,128)(2,1)}', space=vmem, size = 0x10000, scoped, tag = 'scratch operand']
  #allocation4 [shape = 'f32[1]{0:T(128)S(6)}', space=smem, size = 0x200, scoped, tag = 'scoped memory for self_attn_forward.1']
  %s0 = inlined_call_operand.hbm [shape: f32[2,256,32], index: 0, kind: input, shape index: {}]
  %s1 = inlined_call_operand.vmem [shape: f32[32,4], index: 1, kind: input, shape index: {}]
  %s2 = inlined_call_operand.vmem [shape: f32[1,4], index: 2, kind: input, shape index: {}]
  %s3 = inlined_call_operand.vmem [shape: f32[32,4], index: 3, kind: input, shape index: {}]
  %s4 = inlined_call_operand.vmem [shape: f32[1,4], index: 4, kind: input, shape index: {}]
  %s5 = inlined_call_operand.vmem [shape: f32[32,32], index: 5, kind: input, shape index: {}]
  %s6 = inlined_call_operand.vmem [shape: f32[1,32], index: 6, kind: input, shape index: {}]
  %s7 = inlined_call_operand.<no memory space> [shape: f32[1], index: 7, kind: input, shape index: {}]
  %s8 = inlined_call_operand.hbm [shape: f32[2,256,32], index: 8, kind: output, shape index: {0}]
  %s9 = inlined_call_operand.hbm [shape: f32[2,256,256], index: 9, kind: output, shape index: {1}]
  %10 = xla_tuple %s8, %s9
  %s11 = sld [smem:[#allocation0]]
  $region81: #{self_attn_forward.1} parent=0
    _
  %s13 = ssub.s32 1, %s11
  %s14 = scalar_select 0, %s13, %s11
  %15 = sst [smem:[#allocation4]] %s7
  $region1: #{self_attn_forward.1} parent=0
    #allocation5 [shape = 'u8[262144]{0}', space=vmem, size = 0x40000, scoped, tag = 'input window, operand 0']
    #allocation6 [shape = 's32[2]{0}', space=sflag, size = 0x8, scoped, tag = 'scoped memory for self_attn_forward.1']
    #allocation7 [shape = 's32[2]{0}', space=sflag, size = 0x8, scoped, tag = 'scoped memory for self_attn_forward.1']
    #allocation8 [shape = 'u8[262144]{0}', space=vmem, size = 0x40000, scoped, tag = 'output window, operand 0']
    #allocation9 [shape = 'u8[524288]{0}', space=vmem, size = 0x80000, scoped, tag = 'output window, operand 1']
    #allocation10 [shape = 's32[2]{0}', space=sflag, size = 0x8, scoped, tag = 'scoped memory for self_attn_forward.1']
    %16 = vsyncpa [#allocation6], 0
    %s17 = scalar_lea.sflag [#allocation6], 1
    %18 = vsyncpa %s17, 0
    %19 = vsyncpa [#allocation7], 0
    %s20 = scalar_lea.sflag [#allocation7], 1
    %21 = vsyncpa %s20, 0
    %22 = vsyncpa [#allocation10], 0
    %s23 = scalar_lea.sflag [#allocation10], 1
    %24 = vsyncpa %s23, 0
    loop: start=0, step=1, limit=4
    $region2: #{self_attn_forward.1} parent=1 // loop_pre_header
      _
    $region3: #{self_attn_forward.1} parent=1 // loop_header
      %s26 = sphi 0, %s30
      %p27 = scmp.ge.s32.totalorder %s26, 4
      %s33 = sphi 0, %s45
      %s34 = sphi 0, %s41
      %s35 = sphi 0, %s33
      %s36 = sphi 0, %s34
      %s37 = sphi 0, %s35
      %s38 = sphi 0, %s36
      %s48 = sphi 0, %s50
      %s51 = sphi 0, %s48
      %s52 = sphi 0, %s51
      %s68 = sphi 0, %s52
      %s72 = sphi 0, %s72
      %s74 = sphi 0, %s72
      %s75 = sphi 0, %s74
      %s89 = sphi 0, %s75
      %s93 = sphi 0, %s93
      %s95 = sphi 0, %s93
      %s96 = sphi 0, %s95
      %s110 = sphi 0, %s96
      %s114 = sphi 0, %s114
      %s116 = sphi 0, %s114
      %s117 = sphi 0, %s116
      %s131 = sphi 0, %s117
      %s135 = sphi 0, %s135
      %s137 = sphi 0, %s135
      %s138 = sphi 0, %s137
      %s152 = sphi 0, %s138
      %s156 = sphi 0, %s156
      %s158 = sphi 0, %s156
      %s159 = sphi 0, %s158
      %s173 = sphi 0, %s159
      %s177 = sphi 0, %s177
      %s179 = sphi 0, %s177
      %s180 = sphi 0, %s179
      %s194 = sphi 0, %s180
      %s198 = sphi 0, %s198
      %s200 = sphi 0, %s198
      %s201 = sphi 0, %s200
      %s215 = sphi 0, %s201
      %s223 = sphi 0, %s225
      %s226 = sphi 0, %s223
      %s227 = sphi 0, %s226
      %s243 = sphi 0, %s227
      %s251 = sphi 0, %s253
      %s254 = sphi 0, %s251
      %s255 = sphi 0, %s254
      %s271 = sphi 0, %s255
    $region4: #{self_attn_forward.1} parent=1 // loop_header_branch
      %29 = sbr.rel (%p27) target = $region8
    $region5: #{self_attn_forward.1} parent=1 // loop_body
      %s31 = ssub.s32 %s26, 1
      %s32 = ssub.s32 %s26, 2
      %s39 = sadd.s32 1, %s34
      %p40 = scmp.ge.s32.totalorder %s39, 1
      %s41 = scalar_select %p40, 0, %s39
      %s42 = sadd.s32 1, %s33
      %s43 = scalar_select %p40, %s42, %s33
      %p44 = scmp.ge.s32.totalorder %s43, 2
      %s45 = scalar_select %p44, 0, %s43
      %s46 = ssub.s32 %s33, %s45
      %p47 = scmp.eq.s32.totalorder %s46, 0
      %s49 = sadd.s32 %s48, 1
      %s50 = scalar_select %p47, %s48, %s49
      %p53 = pneg %p47
      %p54 = scmp.eq.s32.totalorder %s26, 1
      %p55 = por %p53, %p54
      %p56 = scmp.ne.s32.totalorder %s48, %s51
      %p57 = scmp.eq.s32.totalorder %s26, 0
      %p58 = por %p56, %p57
      %p59 = scmp.ne.s32.totalorder %s48, %s51
      %p60 = scmp.eq.s32.totalorder %s31, 1
      %p61 = por %p59, %p60
      %p62 = scmp.ne.s32.totalorder %s51, %s52
      %p63 = scmp.eq.s32.totalorder %s31, 0
      %p64 = por %p62, %p63
      %p65 = scmp.ne.s32.totalorder %s51, %s52
      %p66 = scmp.eq.s32.totalorder %s32, 1
      %p67 = por %p65, %p66
      %p69 = scmp.ne.s32.totalorder %s52, %s68
      %p70 = scmp.eq.s32.totalorder %s32, 0
      %p71 = por %p69, %p70
      %s73 = sadd.s32 %s72, 1
      %p76 = scmp.eq.s32.totalorder %s26, 1
      %p77 = scmp.ne.s32.totalorder %s72, %s74
      %p78 = scmp.eq.s32.totalorder %s26, 0
      %p79 = por %p77, %p78
      %p80 = scmp.ne.s32.totalorder %s72, %s74
      %p81 = scmp.eq.s32.totalorder %s31, 1
      %p82 = por %p80, %p81
      %p83 = scmp.ne.s32.totalorder %s74, %s75
      %p84 = scmp.eq.s32.totalorder %s31, 0
      %p85 = por %p83, %p84
      %p86 = scmp.ne.s32.totalorder %s74, %s75
      %p87 = scmp.eq.s32.totalorder %s32, 1
      %p88 = por %p86, %p87
      %p90 = scmp.ne.s32.totalorder %s75, %s89
      %p91 = scmp.eq.s32.totalorder %s32, 0
      %p92 = por %p90, %p91
      %s94 = sadd.s32 %s93, 1
      %p97 = scmp.eq.s32.totalorder %s26, 1
      %p98 = scmp.ne.s32.totalorder %s93, %s95
      %p99 = scmp.eq.s32.totalorder %s26, 0
      %p100 = por %p98, %p99
      %p101 = scmp.ne.s32.totalorder %s93, %s95
      %p102 = scmp.eq.s32.totalorder %s31, 1
      %p103 = por %p101, %p102
      %p104 = scmp.ne.s32.totalorder %s95, %s96
      %p105 = scmp.eq.s32.totalorder %s31, 0
      %p106 = por %p104, %p105
      %p107 = scmp.ne.s32.totalorder %s95, %s96
      %p108 = scmp.eq.s32.totalorder %s32, 1
      %p109 = por %p107, %p108
      %p111 = scmp.ne.s32.totalorder %s96, %s110
      %p112 = scmp.eq.s32.totalorder %s32, 0
      %p113 = por %p111, %p112
      %s115 = sadd.s32 %s114, 1
      %p118 = scmp.eq.s32.totalorder %s26, 1
      %p119 = scmp.ne.s32.totalorder %s114, %s116
      %p120 = scmp.eq.s32.totalorder %s26, 0
      %p121 = por %p119, %p120
      %p122 = scmp.ne.s32.totalorder %s114, %s116
      %p123 = scmp.eq.s32.totalorder %s31, 1
      %p124 = por %p122, %p123
      %p125 = scmp.ne.s32.totalorder %s116, %s117
      %p126 = scmp.eq.s32.totalorder %s31, 0
      %p127 = por %p125, %p126
      %p128 = scmp.ne.s32.totalorder %s116, %s117
      %p129 = scmp.eq.s32.totalorder %s32, 1
      %p130 = por %p128, %p129
      %p132 = scmp.ne.s32.totalorder %s117, %s131
      %p133 = scmp.eq.s32.totalorder %s32, 0
      %p134 = por %p132, %p133
      %s136 = sadd.s32 %s135, 1
      %p139 = scmp.eq.s32.totalorder %s26, 1
      %p140 = scmp.ne.s32.totalorder %s135, %s137
      %p141 = scmp.eq.s32.totalorder %s26, 0
      %p142 = por %p140, %p141
      %p143 = scmp.ne.s32.totalorder %s135, %s137
      %p144 = scmp.eq.s32.totalorder %s31, 1
      %p145 = por %p143, %p144
      %p146 = scmp.ne.s32.totalorder %s137, %s138
      %p147 = scmp.eq.s32.totalorder %s31, 0
      %p148 = por %p146, %p147
      %p149 = scmp.ne.s32.totalorder %s137, %s138
      %p150 = scmp.eq.s32.totalorder %s32, 1
      %p151 = por %p149, %p150
      %p153 = scmp.ne.s32.totalorder %s138, %s152
      %p154 = scmp.eq.s32.totalorder %s32, 0
      %p155 = por %p153, %p154
      %s157 = sadd.s32 %s156, 1
      %p160 = scmp.eq.s32.totalorder %s26, 1
      %p161 = scmp.ne.s32.totalorder %s156, %s158
      %p162 = scmp.eq.s32.totalorder %s26, 0
      %p163 = por %p161, %p162
      %p164 = scmp.ne.s32.totalorder %s156, %s158
      %p165 = scmp.eq.s32.totalorder %s31, 1
      %p166 = por %p164, %p165
      %p167 = scmp.ne.s32.totalorder %s158, %s159
      %p168 = scmp.eq.s32.totalorder %s31, 0
      %p169 = por %p167, %p168
      %p170 = scmp.ne.s32.totalorder %s158, %s159
      %p171 = scmp.eq.s32.totalorder %s32, 1
      %p172 = por %p170, %p171
      %p174 = scmp.ne.s32.totalorder %s159, %s173
      %p175 = scmp.eq.s32.totalorder %s32, 0
      %p176 = por %p174, %p175
      %s178 = sadd.s32 %s177, 1
      %p181 = scmp.eq.s32.totalorder %s26, 1
      %p182 = scmp.ne.s32.totalorder %s177, %s179
      %p183 = scmp.eq.s32.totalorder %s26, 0
      %p184 = por %p182, %p183
      %p185 = scmp.ne.s32.totalorder %s177, %s179
      %p186 = scmp.eq.s32.totalorder %s31, 1
      %p187 = por %p185, %p186
      %p188 = scmp.ne.s32.totalorder %s179, %s180
      %p189 = scmp.eq.s32.totalorder %s31, 0
      %p190 = por %p188, %p189
      %p191 = scmp.ne.s32.totalorder %s179, %s180
      %p192 = scmp.eq.s32.totalorder %s32, 1
      %p193 = por %p191, %p192
      %p195 = scmp.ne.s32.totalorder %s180, %s194
      %p196 = scmp.eq.s32.totalorder %s32, 0
      %p197 = por %p195, %p196
      %s199 = sadd.s32 %s198, 1
      %p202 = scmp.eq.s32.totalorder %s26, 1
      %p203 = scmp.ne.s32.totalorder %s198, %s200
      %p204 = scmp.eq.s32.totalorder %s26, 0
      %p205 = por %p203, %p204
      %p206 = scmp.ne.s32.totalorder %s198, %s200
      %p207 = scmp.eq.s32.totalorder %s31, 1
      %p208 = por %p206, %p207
      %p209 = scmp.ne.s32.totalorder %s200, %s201
      %p210 = scmp.eq.s32.totalorder %s31, 0
      %p211 = por %p209, %p210
      %p212 = scmp.ne.s32.totalorder %s200, %s201
      %p213 = scmp.eq.s32.totalorder %s32, 1
      %p214 = por %p212, %p213
      %p216 = scmp.ne.s32.totalorder %s201, %s215
      %p217 = scmp.eq.s32.totalorder %s32, 0
      %p218 = por %p216, %p217
      %s219 = ssub.s32 %s33, %s45
      %s220 = ssub.s32 %s34, %s41
      %s221 = sor.u32 %s219, %s220
      %p222 = scmp.eq.s32.totalorder %s221, 0
      %s224 = sadd.s32 %s223, 1
      %s225 = scalar_select %p222, %s223, %s224
      %p228 = pneg %p222
      %p229 = scmp.eq.s32.totalorder %s26, 1
      %p230 = por %p228, %p229
      %p231 = scmp.ne.s32.totalorder %s223, %s226
      %p232 = scmp.eq.s32.totalorder %s26, 0
      %p233 = por %p231, %p232
      %p234 = scmp.ne.s32.totalorder %s223, %s226
      %p235 = scmp.eq.s32.totalorder %s31, 1
      %p236 = por %p234, %p235
      %p237 = scmp.ne.s32.totalorder %s226, %s227
      %p238 = scmp.eq.s32.totalorder %s31, 0
      %p239 = por %p237, %p238
      %p240 = scmp.ne.s32.totalorder %s226, %s227
      %p241 = scmp.eq.s32.totalorder %s32, 1
      %p242 = por %p240, %p241
      %p244 = scmp.ne.s32.totalorder %s227, %s243
      %p245 = scmp.eq.s32.totalorder %s32, 0
      %p246 = por %p244, %p245
      %s247 = ssub.s32 %s33, %s45
      %s248 = ssub.s32 %s34, %s41
      %s249 = sor.u32 %s247, %s248
      %p250 = scmp.eq.s32.totalorder %s249, 0
      %s252 = sadd.s32 %s251, 1
      %s253 = scalar_select %p250, %s251, %s252
      %p256 = pneg %p250
      %p257 = scmp.eq.s32.totalorder %s26, 1
      %p258 = por %p256, %p257
      %p259 = scmp.ne.s32.totalorder %s251, %s254
      %p260 = scmp.eq.s32.totalorder %s26, 0
      %p261 = por %p259, %p260
      %p262 = scmp.ne.s32.totalorder %s251, %s254
      %p263 = scmp.eq.s32.totalorder %s31, 1
      %p264 = por %p262, %p263
      %p265 = scmp.ne.s32.totalorder %s254, %s255
      %p266 = scmp.eq.s32.totalorder %s31, 0
      %p267 = por %p265, %p266
      %p268 = scmp.ne.s32.totalorder %s254, %s255
      %p269 = scmp.eq.s32.totalorder %s32, 1
      %p270 = por %p268, %p269
      %p272 = scmp.ne.s32.totalorder %s255, %s271
      %p273 = scmp.eq.s32.totalorder %s32, 0
      %p274 = por %p272, %p273
      %p275 = scmp.le.s32.totalorder 1, %s26
      %p276 = scmp.lt.s32.totalorder %s26, 3
      %p277 = pnand %p275, %p276
      %p278 = pneg %p277
      // Predicated region
      $region9: #{self_attn_forward.1} parent=5 // pred_check
        _
      $region10: #{self_attn_forward.1} parent=5 // pred_check_branch
        %280 = sbr.rel (%p277) target = $region12
      $region11: #{self_attn_forward.1} parent=5 // pred_region
        %s281 = ssub.s32 %s26, 1
        // Predicated region
        $region13: #{self_attn_forward.1} parent=11 // pred_check
          %p282 = pneg %p85
        $region14: #{self_attn_forward.1} parent=11 // pred_check_branch
          %284 = sbr.rel (%p282) target = $region16
        $region15: #{self_attn_forward.1} parent=11 // pred_region
          _
        $region16: #{self_attn_forward.1} parent=11 // pred_fallthru
          _
        // Predicated region
        $region17: #{self_attn_forward.1} parent=11 // pred_check
          %p285 = pneg %p106
        $region18: #{self_attn_forward.1} parent=11 // pred_check_branch
          %287 = sbr.rel (%p285) target = $region20
        $region19: #{self_attn_forward.1} parent=11 // pred_region
          _
        $region20: #{self_attn_forward.1} parent=11 // pred_fallthru
          _
        // Predicated region
        $region21: #{self_attn_forward.1} parent=11 // pred_check
          %p288 = pneg %p127
        $region22: #{self_attn_forward.1} parent=11 // pred_check_branch
          %290 = sbr.rel (%p288) target = $region24
        $region23: #{self_attn_forward.1} parent=11 // pred_region
          _
        $region24: #{self_attn_forward.1} parent=11 // pred_fallthru
          _
        // Predicated region
        $region25: #{self_attn_forward.1} parent=11 // pred_check
          %p291 = pneg %p148
        $region26: #{self_attn_forward.1} parent=11 // pred_check_branch
          %293 = sbr.rel (%p291) target = $region28
        $region27: #{self_attn_forward.1} parent=11 // pred_region
          _
        $region28: #{self_attn_forward.1} parent=11 // pred_fallthru
          _
        // Predicated region
        $region29: #{self_attn_forward.1} parent=11 // pred_check
          %p294 = pneg %p169
        $region30: #{self_attn_forward.1} parent=11 // pred_check_branch
          %296 = sbr.rel (%p294) target = $region32
        $region31: #{self_attn_forward.1} parent=11 // pred_region
          _
        $region32: #{self_attn_forward.1} parent=11 // pred_fallthru
          _
        // Predicated region
        $region33: #{self_attn_forward.1} parent=11 // pred_check
          %p297 = pneg %p190
        $region34: #{self_attn_forward.1} parent=11 // pred_check_branch
          %299 = sbr.rel (%p297) target = $region36
        $region35: #{self_attn_forward.1} parent=11 // pred_region
          _
        $region36: #{self_attn_forward.1} parent=11 // pred_fallthru
          _
        // Predicated region
        $region37: #{self_attn_forward.1} parent=11 // pred_check
          %p300 = pneg %p211
        $region38: #{self_attn_forward.1} parent=11 // pred_check_branch
          %302 = sbr.rel (%p300) target = $region40
        $region39: #{self_attn_forward.1} parent=11 // pred_region
          _
        $region40: #{self_attn_forward.1} parent=11 // pred_fallthru
          _
      $region12: #{self_attn_forward.1} parent=5 // pred_fallthru
        _
      %p303 = scmp.lt.s32.totalorder %s26, 2
      // Predicated region
      $region41: #{self_attn_forward.1} parent=5 // pred_check
        %p304 = pneg %p303
      $region42: #{self_attn_forward.1} parent=5 // pred_check_branch
        %306 = sbr.rel (%p304) target = $region44
      $region43: #{self_attn_forward.1} parent=5 // pred_region
        // Predicated region
        $region45: #{self_attn_forward.1} parent=43 // pred_check
          %p307 = pneg %p58
        $region46: #{self_attn_forward.1} parent=43 // pred_check_branch
          %309 = sbr.rel (%p307) target = $region48
        $region47: #{self_attn_forward.1} parent=43 // pred_region
          %s310 = sand.u32 %s48, 1
          %s311 = scalar_lea.sflag [#allocation6], %s310
          %s312 = sand.u32 %s48, 1
          %s313 = smul.addr %s312, 256
          %s314 = scalar_lea.vmem [#allocation5], %s313
          %s316 = ssub.s32 4096, 4096
          %317 = vsyncadd %s311, %s316
          %s318 = smul.addr %s33, 32
          %s319 = smul.addr %s318, 128
          %s320 = scalar_lea.hbm %s0, %s319
          %s321 = sshll.u32 %s314, 4
          %s322 = int_to_ptr.vmem [resolvable:$true] %s321
          %327 = dma.hbm_to_vmem [thread:$0]  %s320, 4096, %s322, %s311, 128, 128, 8
        $region48: #{self_attn_forward.1} parent=43 // pred_fallthru
          _
      $region44: #{self_attn_forward.1} parent=5 // pred_fallthru
        _
      %p328 = scmp.le.s32.totalorder 1, %s26
      %p329 = scmp.lt.s32.totalorder %s26, 3
      %p330 = pnand %p328, %p329
      %p331 = pneg %p330
      // Predicated region
      $region49: #{self_attn_forward.1} parent=5 // pred_check
        _
      $region50: #{self_attn_forward.1} parent=5 // pred_check_branch
        %333 = sbr.rel (%p330) target = $region52
      $region51: #{self_attn_forward.1} parent=5 // pred_region
        %s334 = ssub.s32 %s26, 1
        %s335 = sand.u32 %s51, 1
        %s336 = scalar_lea.sflag [#allocation6], %s335
        %s337 = sand.u32 %s51, 1
        %s338 = smul.addr %s337, 256
        %s339 = scalar_lea.vmem [#allocation5], %s338
        // Predicated region
        $region53: #{self_attn_forward.1} parent=51 // pred_check
          %p340 = pneg %p64
        $region54: #{self_attn_forward.1} parent=51 // pred_check_branch
          %342 = sbr.rel (%p340) target = $region56
        $region55: #{self_attn_forward.1} parent=51 // pred_region
          %343 = dma.done %s336, 4096
        $region56: #{self_attn_forward.1} parent=51 // pred_fallthru
          _
        %s344 = sand.u32 %s51, 1
        %s345 = scalar_lea.sflag [#allocation6], %s344
        %s346 = sand.u32 %s51, 1
        %s347 = smul.addr %s346, 256
        %s348 = scalar_lea.vmem [#allocation5], %s347
        %p349 = pneg %p64
        %p350 = pneg %p61
        %p351 = pneg %p85
        %p352 = pneg %p82
        %p353 = pneg %p106
        %p354 = pneg %p103
        %p355 = pneg %p127
        %p356 = pneg %p124
        %p357 = pneg %p148
        %p358 = pneg %p145
        %p359 = pneg %p169
        %p360 = pneg %p166
        %p361 = pneg %p190
        %p362 = pneg %p187
        %p363 = pneg %p211
        %p364 = pneg %p208
        %p365 = pneg %p239
        %p366 = pneg %p236
        %s367 = sand.u32 %s226, 1
        %s368 = scalar_lea.sflag [#allocation7], %s367
        %s369 = sand.u32 %s226, 1
        %s370 = smul.addr %s369, 256
        %s371 = scalar_lea.vmem [#allocation8], %s370
        %p372 = pneg %p267
        %p373 = pneg %p264
        %s374 = sand.u32 %s254, 1
        %s375 = scalar_lea.sflag [#allocation10], %s374
        %s376 = sand.u32 %s254, 1
        %s377 = smul.addr %s376, 512
        %s378 = scalar_lea.vmem [#allocation9], %s377
        %s379 = smul.u32 32, %s36
        %s380 = smul.u32 32, %s36
        %p382 = scmp.eq.s32.totalorder %s36, 0
        // Predicated region
        $region57: #{self_attn_forward.1} parent=51 // pred_check
          %p383 = pneg %p382
        $region58: #{self_attn_forward.1} parent=51 // pred_check_branch
          %385 = sbr.rel (%p383) target = $region60
        $region59: #{self_attn_forward.1} parent=51 // pred_region
          %v386 = vld [vmem:[%s339] sm:$0xff]
          %v387 = vld [vmem:[%s339 + $0x8] sm:$0xff]
          %v388 = vld [vmem:[%s339 + $0x10] sm:$0xff]
          %v389 = vld [vmem:[%s339 + $0x18] sm:$0xff]
          %v390 = vld [vmem:[%s339 + $0x20] sm:$0xff]
          %v391 = vld [vmem:[%s339 + $0x28] sm:$0xff]
          %v392 = vld [vmem:[%s339 + $0x30] sm:$0xff]
          %v393 = vld [vmem:[%s339 + $0x38] sm:$0xff]
          %v394 = vld [vmem:[%s339 + $0x40] sm:$0xff]
          %v395 = vld [vmem:[%s339 + $0x48] sm:$0xff]
          %v396 = vld [vmem:[%s339 + $0x50] sm:$0xff]
          %v397 = vld [vmem:[%s339 + $0x58] sm:$0xff]
          %v398 = vld [vmem:[%s339 + $0x60] sm:$0xff]
          %v399 = vld [vmem:[%s339 + $0x68] sm:$0xff]
          %v400 = vld [vmem:[%s339 + $0x70] sm:$0xff]
          %v401 = vld [vmem:[%s339 + $0x78] sm:$0xff]
          %v402 = vld [vmem:[%s339 + $0x80] sm:$0xff]
          %v403 = vld [vmem:[%s339 + $0x88] sm:$0xff]
          %v404 = vld [vmem:[%s339 + $0x90] sm:$0xff]
          %v405 = vld [vmem:[%s339 + $0x98] sm:$0xff]
          %v406 = vld [vmem:[%s339 + $0xa0] sm:$0xff]
          %v407 = vld [vmem:[%s339 + $0xa8] sm:$0xff]
          %v408 = vld [vmem:[%s339 + $0xb0] sm:$0xff]
          %v409 = vld [vmem:[%s339 + $0xb8] sm:$0xff]
          %v410 = vld [vmem:[%s339 + $0xc0] sm:$0xff]
          %v411 = vld [vmem:[%s339 + $0xc8] sm:$0xff]
          %v412 = vld [vmem:[%s339 + $0xd0] sm:$0xff]
          %v413 = vld [vmem:[%s339 + $0xd8] sm:$0xff]
          %v414 = vld [vmem:[%s339 + $0xe0] sm:$0xff]
          %v415 = vld [vmem:[%s339 + $0xe8] sm:$0xff]
          %v416 = vld [vmem:[%s339 + $0xf0] sm:$0xff]
          %v417 = vld [vmem:[%s339 + $0xf8] sm:$0xff]
          %v418 = vpack.c.bf16 %v387, %v386
          %v419 = vpack.c.bf16 %v389, %v388
          %v420 = vpack.c.bf16 %v391, %v390
          %v421 = vpack.c.bf16 %v393, %v392
          %v422 = vpack.c.bf16 %v395, %v394
          %v423 = vpack.c.bf16 %v397, %v396
          %v424 = vpack.c.bf16 %v399, %v398
          %v425 = vpack.c.bf16 %v401, %v400
          %v426 = vpack.c.bf16 %v403, %v402
          %v427 = vpack.c.bf16 %v405, %v404
          %v428 = vpack.c.bf16 %v407, %v406
          %v429 = vpack.c.bf16 %v409, %v408
          %v430 = vpack.c.bf16 %v411, %v410
          %v431 = vpack.c.bf16 %v413, %v412
          %v432 = vpack.c.bf16 %v415, %v414
          %v433 = vpack.c.bf16 %v417, %v416
          %v434 = vld [vmem:[%s3] sm:$0xff]
          %v435 = vld [vmem:[%s3 + $0x8] sm:$0xff]
          %v436 = vld [vmem:[%s3 + $0x10] sm:$0xff]
          %v437 = vld [vmem:[%s3 + $0x18] sm:$0xff]
          %v438 = vpack.c.bf16 %v435, %v434
          %v439 = vpack.c.bf16 %v437, %v436
          %v440 = vld [vmem:[%s4] sm:$0x1]
          %v442 = vlaneseq
          %v443 = vshrl.u32 %v442, 7
          %v444 = vsub.s32 0, %v443
          %v445 = vrot.slane %v440, %v444
          %vm447 = vcmask 261120
          %v449 = vsel %vm447, %v418, 0
          %v452 = vsel %vm447, %v419, 0
          %v455 = vsel %vm447, %v420, 0
          %v458 = vsel %vm447, %v421, 0
          %v461 = vsel %vm447, %v422, 0
          %v464 = vsel %vm447, %v423, 0
          %v467 = vsel %vm447, %v424, 0
          %v470 = vsel %vm447, %v425, 0
          %v473 = vsel %vm447, %v426, 0
          %v476 = vsel %vm447, %v427, 0
          %v479 = vsel %vm447, %v428, 0
          %v482 = vsel %vm447, %v429, 0
          %v485 = vsel %vm447, %v430, 0
          %v488 = vsel %vm447, %v431, 0
          %v491 = vsel %vm447, %v432, 0
          %v494 = vsel %vm447, %v433, 0
          %496 = vmatprep.subr.bf16.mxu0 0
          %497 = vmatpush1.bf16.msra.mxu0 %v438
          %498 = vmatprep.subr.bf16.mxu0 0
          %499 = vmatpush1.bf16.msra.mxu0 %v439
          %500 = vmatprep.subr.bf16.mxu0 0
          %501 = vmatpush1.bf16.msra.mxu0 0
          %502 = vmatprep.subr.bf16.mxu0 0
          %503 = vmatpush1.bf16.msra.mxu0 0
          %504 = vmatprep.subr.bf16.mxu0 0
          %505 = vmatpush1.bf16.msra.mxu0 0
          %506 = vmatprep.subr.bf16.mxu0 0
          %507 = vmatpush1.bf16.msra.mxu0 0
          %508 = vmatprep.subr.bf16.mxu0 0
          %509 = vmatpush1.bf16.msra.mxu0 0
          %510 = vmatprep.subr.bf16.mxu0 0
          %511 = vmatpush1.bf16.msra.mxu0 0
          %512 = vmatprep.subr.bf16.mxu0 0
          %513 = vmatpush1.bf16.msra.mxu0 0
          %514 = vmatprep.subr.bf16.mxu0 0
          %515 = vmatpush1.bf16.msra.mxu0 0
          %516 = vmatprep.subr.bf16.mxu0 0
          %517 = vmatpush1.bf16.msra.mxu0 0
          %518 = vmatprep.subr.bf16.mxu0 0
          %519 = vmatpush1.bf16.msra.mxu0 0
          %520 = vmatprep.subr.bf16.mxu0 0
          %521 = vmatpush1.bf16.msra.mxu0 0
          %522 = vmatprep.subr.bf16.mxu0 0
          %523 = vmatpush1.bf16.msra.mxu0 0
          %524 = vmatprep.subr.bf16.mxu0 0
          %525 = vmatpush1.bf16.msra.mxu0 0
          %526 = vmatprep.subr.bf16.mxu0 0
          %527 = vmatpush1.bf16.msra.mxu0 0
          %528 = vmatprep.mubr.bf16.mxu0 0
          %529 = vmatmul.mubr.bf16.gmra.mrb[0].mxu0 %v449
          %v530 = vpop.f32.mrb[0].mxu0
          %v531 = vadd.f32 %v445, %v530
          %v532 = vpop.f32.mrb[0].mxu0
          %v533 = vpop.f32.mrb[0].mxu0
          %v534 = vadd.f32 %v445, %v533
          %v535 = vpop.f32.mrb[0].mxu0
          %536 = vmatprep.mubr.bf16.mxu0 0
          %537 = vmatmul.mubr.bf16.gmra.mrb[0].mxu0 %v452
          %v538 = vpop.f32.mrb[0].mxu0
          %v539 = vadd.f32 %v445, %v538
          %v540 = vpop.f32.mrb[0].mxu0
          %v541 = vpop.f32.mrb[0].mxu0
          %v542 = vadd.f32 %v445, %v541
          %v543 = vpop.f32.mrb[0].mxu0
          %544 = vmatprep.mubr.bf16.mxu0 0
          %545 = vmatmul.mubr.bf16.gmra.mrb[0].mxu0 %v455
          %v546 = vpop.f32.mrb[0].mxu0
          %v547 = vadd.f32 %v445, %v546
          %v548 = vpop.f32.mrb[0].mxu0
          %v549 = vpop.f32.mrb[0].mxu0
          %v550 = vadd.f32 %v445, %v549
          %v551 = vpop.f32.mrb[0].mxu0
          %552 = vmatprep.mubr.bf16.mxu0 0
          %553 = vmatmul.mubr.bf16.gmra.mrb[0].mxu0 %v458
          %v554 = vpop.f32.mrb[0].mxu0
          %v555 = vadd.f32 %v445, %v554
          %v556 = vpop.f32.mrb[0].mxu0
          %v557 = vpop.f32.mrb[0].mxu0
          %v558 = vadd.f32 %v445, %v557
          %v559 = vpop.f32.mrb[0].mxu0
          %560 = vmatprep.mubr.bf16.mxu0 0
          %561 = vmatmul.mubr.bf16.gmra.mrb[0].mxu0 %v461
          %v562 = vpop.f32.mrb[0].mxu0
          %v563 = vadd.f32 %v445, %v562
          %v564 = vpop.f32.mrb[0].mxu0
          %v565 = vpop.f32.mrb[0].mxu0
          %v566 = vadd.f32 %v445, %v565
          %v567 = vpop.f32.mrb[0].mxu0
          %568 = vmatprep.mubr.bf16.mxu0 0
          %569 = vmatmul.mubr.bf16.gmra.mrb[0].mxu0 %v464
          %v570 = vpop.f32.mrb[0].mxu0
          %v571 = vadd.f32 %v445, %v570
          %v572 = vpop.f32.mrb[0].mxu0
          %v573 = vpop.f32.mrb[0].mxu0
          %v574 = vadd.f32 %v445, %v573
          %v575 = vpop.f32.mrb[0].mxu0
          %576 = vmatprep.mubr.bf16.mxu0 0
          %577 = vmatmul.mubr.bf16.gmra.mrb[0].mxu0 %v467
          %v578 = vpop.f32.mrb[0].mxu0
          %v579 = vadd.f32 %v445, %v578
          %v580 = vpop.f32.mrb[0].mxu0
          %v581 = vpop.f32.mrb[0].mxu0
          %v582 = vadd.f32 %v445, %v581
          %v583 = vpop.f32.mrb[0].mxu0
          %584 = vmatprep.mubr.bf16.mxu0 0
          %585 = vmatmul.mubr.bf16.gmra.mrb[0].mxu0 %v470
          %v586 = vpop.f32.mrb[0].mxu0
          %v587 = vadd.f32 %v445, %v586
          %v588 = vpop.f32.mrb[0].mxu0
          %v589 = vpop.f32.mrb[0].mxu0
          %v590 = vadd.f32 %v445, %v589
          %v591 = vpop.f32.mrb[0].mxu0
          %592 = vmatprep.mubr.bf16.mxu0 0
          %593 = vmatmul.mubr.bf16.gmra.mrb[0].mxu0 %v473
          %v594 = vpop.f32.mrb[0].mxu0
          %v595 = vadd.f32 %v445, %v594
          %v596 = vpop.f32.mrb[0].mxu0
          %v597 = vpop.f32.mrb[0].mxu0
          %v598 = vadd.f32 %v445, %v597
          %v599 = vpop.f32.mrb[0].mxu0
          %600 = vmatprep.mubr.bf16.mxu0 0
          %601 = vmatmul.mubr.bf16.gmra.mrb[0].mxu0 %v476
          %v602 = vpop.f32.mrb[0].mxu0
          %v603 = vadd.f32 %v445, %v602
          %v604 = vpop.f32.mrb[0].mxu0
          %v605 = vpop.f32.mrb[0].mxu0
          %v606 = vadd.f32 %v445, %v605
          %v607 = vpop.f32.mrb[0].mxu0
          %608 = vmatprep.mubr.bf16.mxu0 0
          %609 = vmatmul.mubr.bf16.gmra.mrb[0].mxu0 %v479
          %v610 = vpop.f32.mrb[0].mxu0
          %v611 = vadd.f32 %v445, %v610
          %v612 = vpop.f32.mrb[0].mxu0
          %v613 = vpop.f32.mrb[0].mxu0
          %v614 = vadd.f32 %v445, %v613
          %v615 = vpop.f32.mrb[0].mxu0
          %616 = vmatprep.mubr.bf16.mxu0 0
          %617 = vmatmul.mubr.bf16.gmra.mrb[0].mxu0 %v482
          %v618 = vpop.f32.mrb[0].mxu0
          %v619 = vadd.f32 %v445, %v618
          %v620 = vpop.f32.mrb[0].mxu0
          %v621 = vpop.f32.mrb[0].mxu0
          %v622 = vadd.f32 %v445, %v621
          %v623 = vpop.f32.mrb[0].mxu0
          %624 = vmatprep.mubr.bf16.mxu0 0
          %625 = vmatmul.mubr.bf16.gmra.mrb[0].mxu0 %v485
          %v626 = vpop.f32.mrb[0].mxu0
          %v627 = vadd.f32 %v445, %v626
          %v628 = vpop.f32.mrb[0].mxu0
          %v629 = vpop.f32.mrb[0].mxu0
          %v630 = vadd.f32 %v445, %v629
          %v631 = vpop.f32.mrb[0].mxu0
          %632 = vmatprep.mubr.bf16.mxu0 0
          %633 = vmatmul.mubr.bf16.gmra.mrb[0].mxu0 %v488
          %v634 = vpop.f32.mrb[0].mxu0
          %v635 = vadd.f32 %v445, %v634
          %v636 = vpop.f32.mrb[0].mxu0
          %v637 = vpop.f32.mrb[0].mxu0
          %v638 = vadd.f32 %v445, %v637
          %v639 = vpop.f32.mrb[0].mxu0
          %640 = vmatprep.mubr.bf16.mxu0 0
          %641 = vmatmul.mubr.bf16.gmra.mrb[0].mxu0 %v491
          %v642 = vpop.f32.mrb[0].mxu0
          %v643 = vadd.f32 %v445, %v642
          %v644 = vpop.f32.mrb[0].mxu0
          %v645 = vpop.f32.mrb[0].mxu0
          %v646 = vadd.f32 %v445, %v645
          %v647 = vpop.f32.mrb[0].mxu0
          %648 = vmatprep.mubr.bf16.mxu0 0
          %649 = vmatmul.mubr.bf16.gmra.mrb[0].mxu0 %v494
          %v650 = vpop.f32.mrb[0].mxu0
          %v651 = vadd.f32 %v445, %v650
          %v652 = vpop.f32.mrb[0].mxu0
          %v653 = vpop.f32.mrb[0].mxu0
          %v654 = vadd.f32 %v445, %v653
          %v655 = vpop.f32.mrb[0].mxu0
          %656 = vdwg.mxu0
          %v657 = vld [vmem:[%s5] sm:$0xff]
          %v658 = vld [vmem:[%s5 + $0x8] sm:$0xff]
          %v659 = vld [vmem:[%s5 + $0x10] sm:$0xff]
          %v660 = vld [vmem:[%s5 + $0x18] sm:$0xff]
          %v661 = vpack.c.bf16 %v658, %v657
          %v662 = vpack.c.bf16 %v660, %v659
          %v663 = vld [vmem:[%s6] sm:$0x1]
          %v665 = vlaneseq
          %v666 = vshrl.u32 %v665, 7
          %v667 = vsub.s32 0, %v666
          %v668 = vrot.slane %v663, %v667
          %670 = vmatprep.subr.bf16.mxu0 0
          %671 = vmatpush1.bf16.msra.mxu0 %v661
          %672 = vmatprep.subr.bf16.mxu0 0
          %673 = vmatpush1.bf16.msra.mxu0 %v662
          %674 = vmatprep.subr.bf16.mxu0 0
          %675 = vmatpush1.bf16.msra.mxu0 0
          %676 = vmatprep.subr.bf16.mxu0 0
          %677 = vmatpush1.bf16.msra.mxu0 0
          %678 = vmatprep.subr.bf16.mxu0 0
          %679 = vmatpush1.bf16.msra.mxu0 0
          %680 = vmatprep.subr.bf16.mxu0 0
          %681 = vmatpush1.bf16.msra.mxu0 0
          %682 = vmatprep.subr.bf16.mxu0 0
          %683 = vmatpush1.bf16.msra.mxu0 0
          %684 = vmatprep.subr.bf16.mxu0 0
          %685 = vmatpush1.bf16.msra.mxu0 0
          %686 = vmatprep.subr.bf16.mxu0 0
          %687 = vmatpush1.bf16.msra.mxu0 0
          %688 = vmatprep.subr.bf16.mxu0 0
          %689 = vmatpush1.bf16.msra.mxu0 0
          %690 = vmatprep.subr.bf16.mxu0 0
          %691 = vmatpush1.bf16.msra.mxu0 0
          %692 = vmatprep.subr.bf16.mxu0 0
          %693 = vmatpush1.bf16.msra.mxu0 0
          %694 = vmatprep.subr.bf16.mxu0 0
          %695 = vmatpush1.bf16.msra.mxu0 0
          %696 = vmatprep.subr.bf16.mxu0 0
          %697 = vmatpush1.bf16.msra.mxu0 0
          %698 = vmatprep.subr.bf16.mxu0 0
          %699 = vmatpush1.bf16.msra.mxu0 0
          %700 = vmatprep.subr.bf16.mxu0 0
          %701 = vmatpush1.bf16.msra.mxu0 0
          %702 = vmatprep.mubr.bf16.mxu0 0
          %703 = vmatmul.mubr.bf16.gmra.mrb[0].mxu0 %v449
          %v704 = vpop.f32.mrb[0].mxu0
          %v705 = vadd.f32 %v668, %v704
          %v706 = vpop.f32.mrb[0].mxu0
          %v707 = vpop.f32.mrb[0].mxu0
          %v708 = vadd.f32 %v668, %v707
          %v709 = vpop.f32.mrb[0].mxu0
          %710 = vmatprep.mubr.bf16.mxu0 0
          %711 = vmatmul.mubr.bf16.gmra.mrb[0].mxu0 %v452
          %v712 = vpop.f32.mrb[0].mxu0
          %v713 = vadd.f32 %v668, %v712
          %v714 = vpop.f32.mrb[0].mxu0
          %v715 = vpop.f32.mrb[0].mxu0
          %v716 = vadd.f32 %v668, %v715
          %v717 = vpop.f32.mrb[0].mxu0
          %718 = vmatprep.mubr.bf16.mxu0 0
          %719 = vmatmul.mubr.bf16.gmra.mrb[0].mxu0 %v455
          %v720 = vpop.f32.mrb[0].mxu0
          %v721 = vadd.f32 %v668, %v720
          %v722 = vpop.f32.mrb[0].mxu0
          %v723 = vpop.f32.mrb[0].mxu0
          %v724 = vadd.f32 %v668, %v723
          %v725 = vpop.f32.mrb[0].mxu0
          %726 = vmatprep.mubr.bf16.mxu0 0
          %727 = vmatmul.mubr.bf16.gmra.mrb[0].mxu0 %v458
          %v728 = vpop.f32.mrb[0].mxu0
          %v729 = vadd.f32 %v668, %v728
          %v730 = vpop.f32.mrb[0].mxu0
          %v731 = vpop.f32.mrb[0].mxu0
          %v732 = vadd.f32 %v668, %v731
          %v733 = vpop.f32.mrb[0].mxu0
          %734 = vmatprep.mubr.bf16.mxu0 0
          %735 = vmatmul.mubr.bf16.gmra.mrb[0].mxu0 %v461
          %v736 = vpop.f32.mrb[0].mxu0
          %v737 = vadd.f32 %v668, %v736
          %v738 = vpop.f32.mrb[0].mxu0
          %v739 = vpop.f32.mrb[0].mxu0
          %v740 = vadd.f32 %v668, %v739
          %v741 = vpop.f32.mrb[0].mxu0
          %742 = vmatprep.mubr.bf16.mxu0 0
          %743 = vmatmul.mubr.bf16.gmra.mrb[0].mxu0 %v464
          %v744 = vpop.f32.mrb[0].mxu0
          %v745 = vadd.f32 %v668, %v744
          %v746 = vpop.f32.mrb[0].mxu0
          %v747 = vpop.f32.mrb[0].mxu0
          %v748 = vadd.f32 %v668, %v747
          %v749 = vpop.f32.mrb[0].mxu0
          %750 = vmatprep.mubr.bf16.mxu0 0
          %751 = vmatmul.mubr.bf16.gmra.mrb[0].mxu0 %v467
          %v752 = vpop.f32.mrb[0].mxu0
          %v753 = vadd.f32 %v668, %v752
          %v754 = vpop.f32.mrb[0].mxu0
          %v755 = vpop.f32.mrb[0].mxu0
          %v756 = vadd.f32 %v668, %v755
          %v757 = vpop.f32.mrb[0].mxu0
          %758 = vmatprep.mubr.bf16.mxu0 0
          %759 = vmatmul.mubr.bf16.gmra.mrb[0].mxu0 %v470
          %v760 = vpop.f32.mrb[0].mxu0
          %v761 = vadd.f32 %v668, %v760
          %v762 = vpop.f32.mrb[0].mxu0
          %v763 = vpop.f32.mrb[0].mxu0
          %v764 = vadd.f32 %v668, %v763
          %v765 = vpop.f32.mrb[0].mxu0
          %766 = vmatprep.mubr.bf16.mxu0 0
          %767 = vmatmul.mubr.bf16.gmra.mrb[0].mxu0 %v473
          %v768 = vpop.f32.mrb[0].mxu0
          %v769 = vadd.f32 %v668, %v768
          %v770 = vpop.f32.mrb[0].mxu0
          %v771 = vpop.f32.mrb[0].mxu0
          %v772 = vadd.f32 %v668, %v771
          %v773 = vpop.f32.mrb[0].mxu0
          %774 = vmatprep.mubr.bf16.mxu0 0
          %775 = vmatmul.mubr.bf16.gmra.mrb[0].mxu0 %v476
          %v776 = vpop.f32.mrb[0].mxu0
          %v777 = vadd.f32 %v668, %v776
          %v778 = vpop.f32.mrb[0].mxu0
          %v779 = vpop.f32.mrb[0].mxu0
          %v780 = vadd.f32 %v668, %v779
          %v781 = vpop.f32.mrb[0].mxu0
          %782 = vmatprep.mubr.bf16.mxu0 0
          %783 = vmatmul.mubr.bf16.gmra.mrb[0].mxu0 %v479
          %v784 = vpop.f32.mrb[0].mxu0
          %v785 = vadd.f32 %v668, %v784
          %v786 = vpop.f32.mrb[0].mxu0
          %v787 = vpop.f32.mrb[0].mxu0
          %v788 = vadd.f32 %v668, %v787
          %v789 = vpop.f32.mrb[0].mxu0
          %790 = vmatprep.mubr.bf16.mxu0 0
          %791 = vmatmul.mubr.bf16.gmra.mrb[0].mxu0 %v482
          %v792 = vpop.f32.mrb[0].mxu0
          %v793 = vadd.f32 %v668, %v792
          %v794 = vpop.f32.mrb[0].mxu0
          %v795 = vpop.f32.mrb[0].mxu0
          %v796 = vadd.f32 %v668, %v795
          %v797 = vpop.f32.mrb[0].mxu0
          %798 = vmatprep.mubr.bf16.mxu0 0
          %799 = vmatmul.mubr.bf16.gmra.mrb[0].mxu0 %v485
          %v800 = vpop.f32.mrb[0].mxu0
          %v801 = vadd.f32 %v668, %v800
          %v802 = vpop.f32.mrb[0].mxu0
          %v803 = vpop.f32.mrb[0].mxu0
          %v804 = vadd.f32 %v668, %v803
          %v805 = vpop.f32.mrb[0].mxu0
          %806 = vmatprep.mubr.bf16.mxu0 0
          %807 = vmatmul.mubr.bf16.gmra.mrb[0].mxu0 %v488
          %v808 = vpop.f32.mrb[0].mxu0
          %v809 = vadd.f32 %v668, %v808
          %v810 = vpop.f32.mrb[0].mxu0
          %v811 = vpop.f32.mrb[0].mxu0
          %v812 = vadd.f32 %v668, %v811
          %v813 = vpop.f32.mrb[0].mxu0
          %814 = vmatprep.mubr.bf16.mxu0 0
          %815 = vmatmul.mubr.bf16.gmra.mrb[0].mxu0 %v491
          %v816 = vpop.f32.mrb[0].mxu0
          %v817 = vadd.f32 %v668, %v816
          %v818 = vpop.f32.mrb[0].mxu0
          %v819 = vpop.f32.mrb[0].mxu0
          %v820 = vadd.f32 %v668, %v819
          %v821 = vpop.f32.mrb[0].mxu0
          %822 = vmatprep.mubr.bf16.mxu0 0
          %823 = vmatmul.mubr.bf16.gmra.mrb[0].mxu0 %v494
          %v824 = vpop.f32.mrb[0].mxu0
          %v825 = vadd.f32 %v668, %v824
          %v826 = vpop.f32.mrb[0].mxu0
          %v827 = vpop.f32.mrb[0].mxu0
          %v828 = vadd.f32 %v668, %v827
          %v829 = vpop.f32.mrb[0].mxu0
          %830 = vdwg.mxu0
          %v831 = vpack.c.bf16 %v534, %v531
          %v832 = vpack.c.bf16 %v542, %v539
          %v833 = vpack.c.bf16 %v550, %v547
          %v834 = vpack.c.bf16 %v558, %v555
          %v835 = vpack.c.bf16 %v566, %v563
          %v836 = vpack.c.bf16 %v574, %v571
          %v837 = vpack.c.bf16 %v582, %v579
          %v838 = vpack.c.bf16 %v590, %v587
          %v839 = vpack.c.bf16 %v598, %v595
          %v840 = vpack.c.bf16 %v606, %v603
          %v841 = vpack.c.bf16 %v614, %v611
          %v842 = vpack.c.bf16 %v622, %v619
          %v843 = vpack.c.bf16 %v630, %v627
          %v844 = vpack.c.bf16 %v638, %v635
          %v845 = vpack.c.bf16 %v646, %v643
          %v846 = vpack.c.bf16 %v654, %v651
          %vm847 = vcmask 31744
          %848 = vst.msk [vmem:[#allocation2] sm:$0xff] %vm847, %v831
          %849 = vst.msk [vmem:[#allocation2 + $0x8] sm:$0xff] %vm847, %v832
          %850 = vst.msk [vmem:[#allocation2 + $0x10] sm:$0xff] %vm847, %v833
          %851 = vst.msk [vmem:[#allocation2 + $0x18] sm:$0xff] %vm847, %v834
          %852 = vst.msk [vmem:[#allocation2 + $0x20] sm:$0xff] %vm847, %v835
          %853 = vst.msk [vmem:[#allocation2 + $0x28] sm:$0xff] %vm847, %v836
          %854 = vst.msk [vmem:[#allocation2 + $0x30] sm:$0xff] %vm847, %v837
          %855 = vst.msk [vmem:[#allocation2 + $0x38] sm:$0xff] %vm847, %v838
          %856 = vst.msk [vmem:[#allocation2 + $0x40] sm:$0xff] %vm847, %v839
          %857 = vst.msk [vmem:[#allocation2 + $0x48] sm:$0xff] %vm847, %v840
          %858 = vst.msk [vmem:[#allocation2 + $0x50] sm:$0xff] %vm847, %v841
          %859 = vst.msk [vmem:[#allocation2 + $0x58] sm:$0xff] %vm847, %v842
          %860 = vst.msk [vmem:[#allocation2 + $0x60] sm:$0xff] %vm847, %v843
          %861 = vst.msk [vmem:[#allocation2 + $0x68] sm:$0xff] %vm847, %v844
          %862 = vst.msk [vmem:[#allocation2 + $0x70] sm:$0xff] %vm847, %v845
          %863 = vst.msk [vmem:[#allocation2 + $0x78] sm:$0xff] %vm847, %v846
          %v864 = vpack.c.bf16 %v708, %v705
          %v865 = vpack.c.bf16 %v716, %v713
          %v866 = vpack.c.bf16 %v724, %v721
          %v867 = vpack.c.bf16 %v732, %v729
          %v868 = vpack.c.bf16 %v740, %v737
          %v869 = vpack.c.bf16 %v748, %v745
          %v870 = vpack.c.bf16 %v756, %v753
          %v871 = vpack.c.bf16 %v764, %v761
          %v872 = vpack.c.bf16 %v772, %v769
          %v873 = vpack.c.bf16 %v780, %v777
          %v874 = vpack.c.bf16 %v788, %v785
          %v875 = vpack.c.bf16 %v796, %v793
          %v876 = vpack.c.bf16 %v804, %v801
          %v877 = vpack.c.bf16 %v812, %v809
          %v878 = vpack.c.bf16 %v820, %v817
          %v879 = vpack.c.bf16 %v828, %v825
          %880 = vst.msk [vmem:[#allocation3] sm:$0xff] %vm447, %v864
          %881 = vst.msk [vmem:[#allocation3 + $0x8] sm:$0xff] %vm447, %v865
          %882 = vst.msk [vmem:[#allocation3 + $0x10] sm:$0xff] %vm447, %v866
          %883 = vst.msk [vmem:[#allocation3 + $0x18] sm:$0xff] %vm447, %v867
          %884 = vst.msk [vmem:[#allocation3 + $0x20] sm:$0xff] %vm447, %v868
          %885 = vst.msk [vmem:[#allocation3 + $0x28] sm:$0xff] %vm447, %v869
          %886 = vst.msk [vmem:[#allocation3 + $0x30] sm:$0xff] %vm447, %v870
          %887 = vst.msk [vmem:[#allocation3 + $0x38] sm:$0xff] %vm447, %v871
          %888 = vst.msk [vmem:[#allocation3 + $0x40] sm:$0xff] %vm447, %v872
          %889 = vst.msk [vmem:[#allocation3 + $0x48] sm:$0xff] %vm447, %v873
          %890 = vst.msk [vmem:[#allocation3 + $0x50] sm:$0xff] %vm447, %v874
          %891 = vst.msk [vmem:[#allocation3 + $0x58] sm:$0xff] %vm447, %v875
          %892 = vst.msk [vmem:[#allocation3 + $0x60] sm:$0xff] %vm447, %v876
          %893 = vst.msk [vmem:[#allocation3 + $0x68] sm:$0xff] %vm447, %v877
          %894 = vst.msk [vmem:[#allocation3 + $0x70] sm:$0xff] %vm447, %v878
          %895 = vst.msk [vmem:[#allocation3 + $0x78] sm:$0xff] %vm447, %v879
        $region60: #{self_attn_forward.1} parent=51 // pred_fallthru
          _
        %s896 = smul.u32 %s36, 256
        %s897 = scalar_lea.vmem %s339, %s896 [#allocation5]
        %v898 = vld [vmem:[%s897] sm:$0xff]
        %v899 = vld [vmem:[%s897 + $0x8] sm:$0xff]
        %v900 = vld [vmem:[%s897 + $0x10] sm:$0xff]
        %v901 = vld [vmem:[%s897 + $0x18] sm:$0xff]
        %v902 = vld [vmem:[%s897 + $0x20] sm:$0xff]
        %v903 = vld [vmem:[%s897 + $0x28] sm:$0xff]
        %v904 = vld [vmem:[%s897 + $0x30] sm:$0xff]
        %v905 = vld [vmem:[%s897 + $0x38] sm:$0xff]
        %v906 = vld [vmem:[%s897 + $0x40] sm:$0xff]
        %v907 = vld [vmem:[%s897 + $0x48] sm:$0xff]
        %v908 = vld [vmem:[%s897 + $0x50] sm:$0xff]
        %v909 = vld [vmem:[%s897 + $0x58] sm:$0xff]
        %v910 = vld [vmem:[%s897 + $0x60] sm:$0xff]
        %v911 = vld [vmem:[%s897 + $0x68] sm:$0xff]
        %v912 = vld [vmem:[%s897 + $0x70] sm:$0xff]
        %v913 = vld [vmem:[%s897 + $0x78] sm:$0xff]
        %v914 = vld [vmem:[%s897 + $0x80] sm:$0xff]
        %v915 = vld [vmem:[%s897 + $0x88] sm:$0xff]
        %v916 = vld [vmem:[%s897 + $0x90] sm:$0xff]
        %v917 = vld [vmem:[%s897 + $0x98] sm:$0xff]
        %v918 = vld [vmem:[%s897 + $0xa0] sm:$0xff]
        %v919 = vld [vmem:[%s897 + $0xa8] sm:$0xff]
        %v920 = vld [vmem:[%s897 + $0xb0] sm:$0xff]
        %v921 = vld [vmem:[%s897 + $0xb8] sm:$0xff]
        %v922 = vld [vmem:[%s897 + $0xc0] sm:$0xff]
        %v923 = vld [vmem:[%s897 + $0xc8] sm:$0xff]
        %v924 = vld [vmem:[%s897 + $0xd0] sm:$0xff]
        %v925 = vld [vmem:[%s897 + $0xd8] sm:$0xff]
        %v926 = vld [vmem:[%s897 + $0xe0] sm:$0xff]
        %v927 = vld [vmem:[%s897 + $0xe8] sm:$0xff]
        %v928 = vld [vmem:[%s897 + $0xf0] sm:$0xff]
        %v929 = vld [vmem:[%s897 + $0xf8] sm:$0xff]
        %v930 = vpack.c.bf16 %v899, %v898
        %v931 = vpack.c.bf16 %v901, %v900
        %v932 = vpack.c.bf16 %v903, %v902
        %v933 = vpack.c.bf16 %v905, %v904
        %v934 = vpack.c.bf16 %v907, %v906
        %v935 = vpack.c.bf16 %v909, %v908
        %v936 = vpack.c.bf16 %v911, %v910
        %v937 = vpack.c.bf16 %v913, %v912
        %v938 = vpack.c.bf16 %v915, %v914
        %v939 = vpack.c.bf16 %v917, %v916
        %v940 = vpack.c.bf16 %v919, %v918
        %v941 = vpack.c.bf16 %v921, %v920
        %v942 = vpack.c.bf16 %v923, %v922
        %v943 = vpack.c.bf16 %v925, %v924
        %v944 = vpack.c.bf16 %v927, %v926
        %v945 = vpack.c.bf16 %v929, %v928
        %v946 = vld [vmem:[%s1] sm:$0xff]
        %v947 = vld [vmem:[%s1 + $0x8] sm:$0xff]
        %v948 = vld [vmem:[%s1 + $0x10] sm:$0xff]
        %v949 = vld [vmem:[%s1 + $0x18] sm:$0xff]
        %v950 = vpack.c.bf16 %v947, %v946
        %v951 = vpack.c.bf16 %v949, %v948
        %v952 = vld [vmem:[%s2] sm:$0x1]
        %v954 = vlaneseq
        %v955 = vshrl.u32 %v954, 7
        %v956 = vsub.s32 0, %v955
        %v957 = vrot.slane %v952, %v956
        %vm959 = vcmask 261120
        %v961 = vsel %vm959, %v930, 0
        %v964 = vsel %vm959, %v931, 0
        %v967 = vsel %vm959, %v932, 0
        %v970 = vsel %vm959, %v933, 0
        %v973 = vsel %vm959, %v934, 0
        %v976 = vsel %vm959, %v935, 0
        %v979 = vsel %vm959, %v936, 0
        %v982 = vsel %vm959, %v937, 0
        %v985 = vsel %vm959, %v938, 0
        %v988 = vsel %vm959, %v939, 0
        %v991 = vsel %vm959, %v940, 0
        %v994 = vsel %vm959, %v941, 0
        %v997 = vsel %vm959, %v942, 0
        %v1000 = vsel %vm959, %v943, 0
        %v1003 = vsel %vm959, %v944, 0
        %v1006 = vsel %vm959, %v945, 0
        %1008 = vmatprep.subr.bf16.mxu0 0
        %1009 = vmatpush1.bf16.msra.mxu0 %v950
        %1010 = vmatprep.subr.bf16.mxu0 0
        %1011 = vmatpush1.bf16.msra.mxu0 %v951
        %1012 = vmatprep.subr.bf16.mxu0 0
        %1013 = vmatpush1.bf16.msra.mxu0 0
        %1014 = vmatprep.subr.bf16.mxu0 0
        %1015 = vmatpush1.bf16.msra.mxu0 0
        %1016 = vmatprep.subr.bf16.mxu0 0
        %1017 = vmatpush1.bf16.msra.mxu0 0
        %1018 = vmatprep.subr.bf16.mxu0 0
        %1019 = vmatpush1.bf16.msra.mxu0 0
        %1020 = vmatprep.subr.bf16.mxu0 0
        %1021 = vmatpush1.bf16.msra.mxu0 0
        %1022 = vmatprep.subr.bf16.mxu0 0
        %1023 = vmatpush1.bf16.msra.mxu0 0
        %1024 = vmatprep.subr.bf16.mxu0 0
        %1025 = vmatpush1.bf16.msra.mxu0 0
        %1026 = vmatprep.subr.bf16.mxu0 0
        %1027 = vmatpush1.bf16.msra.mxu0 0
        %1028 = vmatprep.subr.bf16.mxu0 0
        %1029 = vmatpush1.bf16.msra.mxu0 0
        %1030 = vmatprep.subr.bf16.mxu0 0
        %1031 = vmatpush1.bf16.msra.mxu0 0
        %1032 = vmatprep.subr.bf16.mxu0 0
        %1033 = vmatpush1.bf16.msra.mxu0 0
        %1034 = vmatprep.subr.bf16.mxu0 0
        %1035 = vmatpush1.bf16.msra.mxu0 0
        %1036 = vmatprep.subr.bf16.mxu0 0
        %1037 = vmatpush1.bf16.msra.mxu0 0
        %1038 = vmatprep.subr.bf16.mxu0 0
        %1039 = vmatpush1.bf16.msra.mxu0 0
        %1040 = vmatprep.mubr.bf16.mxu0 0
        %1041 = vmatmul.mubr.bf16.gmra.mrb[0].mxu0 %v961
        %v1042 = vpop.f32.mrb[0].mxu0
        %v1043 = vadd.f32 %v957, %v1042
        %v1044 = vpop.f32.mrb[0].mxu0
        %v1045 = vpop.f32.mrb[0].mxu0
        %v1046 = vadd.f32 %v957, %v1045
        %v1047 = vpop.f32.mrb[0].mxu0
        %1048 = vmatprep.mubr.bf16.mxu0 0
        %1049 = vmatmul.mubr.bf16.gmra.mrb[0].mxu0 %v964
        %v1050 = vpop.f32.mrb[0].mxu0
        %v1051 = vadd.f32 %v957, %v1050
        %v1052 = vpop.f32.mrb[0].mxu0
        %v1053 = vpop.f32.mrb[0].mxu0
        %v1054 = vadd.f32 %v957, %v1053
        %v1055 = vpop.f32.mrb[0].mxu0
        %1056 = vmatprep.mubr.bf16.mxu0 0
        %1057 = vmatmul.mubr.bf16.gmra.mrb[0].mxu0 %v967
        %v1058 = vpop.f32.mrb[0].mxu0
        %v1059 = vadd.f32 %v957, %v1058
        %v1060 = vpop.f32.mrb[0].mxu0
        %v1061 = vpop.f32.mrb[0].mxu0
        %v1062 = vadd.f32 %v957, %v1061
        %v1063 = vpop.f32.mrb[0].mxu0
        %1064 = vmatprep.mubr.bf16.mxu0 0
        %1065 = vmatmul.mubr.bf16.gmra.mrb[0].mxu0 %v970
        %v1066 = vpop.f32.mrb[0].mxu0
        %v1067 = vadd.f32 %v957, %v1066
        %v1068 = vpop.f32.mrb[0].mxu0
        %v1069 = vpop.f32.mrb[0].mxu0
        %v1070 = vadd.f32 %v957, %v1069
        %v1071 = vpop.f32.mrb[0].mxu0
        %1072 = vmatprep.mubr.bf16.mxu0 0
        %1073 = vmatmul.mubr.bf16.gmra.mrb[0].mxu0 %v973
        %v1074 = vpop.f32.mrb[0].mxu0
        %v1075 = vadd.f32 %v957, %v1074
        %v1076 = vpop.f32.mrb[0].mxu0
        %v1077 = vpop.f32.mrb[0].mxu0
        %v1078 = vadd.f32 %v957, %v1077
        %v1079 = vpop.f32.mrb[0].mxu0
        %1080 = vmatprep.mubr.bf16.mxu0 0
        %1081 = vmatmul.mubr.bf16.gmra.mrb[0].mxu0 %v976
        %v1082 = vpop.f32.mrb[0].mxu0
        %v1083 = vadd.f32 %v957, %v1082
        %v1084 = vpop.f32.mrb[0].mxu0
        %v1085 = vpop.f32.mrb[0].mxu0
        %v1086 = vadd.f32 %v957, %v1085
        %v1087 = vpop.f32.mrb[0].mxu0
        %1088 = vmatprep.mubr.bf16.mxu0 0
        %1089 = vmatmul.mubr.bf16.gmra.mrb[0].mxu0 %v979
        %v1090 = vpop.f32.mrb[0].mxu0
        %v1091 = vadd.f32 %v957, %v1090
        %v1092 = vpop.f32.mrb[0].mxu0
        %v1093 = vpop.f32.mrb[0].mxu0
        %v1094 = vadd.f32 %v957, %v1093
        %v1095 = vpop.f32.mrb[0].mxu0
        %1096 = vmatprep.mubr.bf16.mxu0 0
        %1097 = vmatmul.mubr.bf16.gmra.mrb[0].mxu0 %v982
        %v1098 = vpop.f32.mrb[0].mxu0
        %v1099 = vadd.f32 %v957, %v1098
        %v1100 = vpop.f32.mrb[0].mxu0
        %v1101 = vpop.f32.mrb[0].mxu0
        %v1102 = vadd.f32 %v957, %v1101
        %v1103 = vpop.f32.mrb[0].mxu0
        %1104 = vmatprep.mubr.bf16.mxu0 0
        %1105 = vmatmul.mubr.bf16.gmra.mrb[0].mxu0 %v985
        %v1106 = vpop.f32.mrb[0].mxu0
        %v1107 = vadd.f32 %v957, %v1106
        %v1108 = vpop.f32.mrb[0].mxu0
        %v1109 = vpop.f32.mrb[0].mxu0
        %v1110 = vadd.f32 %v957, %v1109
        %v1111 = vpop.f32.mrb[0].mxu0
        %1112 = vmatprep.mubr.bf16.mxu0 0
        %1113 = vmatmul.mubr.bf16.gmra.mrb[0].mxu0 %v988
        %v1114 = vpop.f32.mrb[0].mxu0
        %v1115 = vadd.f32 %v957, %v1114
        %v1116 = vpop.f32.mrb[0].mxu0
        %v1117 = vpop.f32.mrb[0].mxu0
        %v1118 = vadd.f32 %v957, %v1117
        %v1119 = vpop.f32.mrb[0].mxu0
        %1120 = vmatprep.mubr.bf16.mxu0 0
        %1121 = vmatmul.mubr.bf16.gmra.mrb[0].mxu0 %v991
        %v1122 = vpop.f32.mrb[0].mxu0
        %v1123 = vadd.f32 %v957, %v1122
        %v1124 = vpop.f32.mrb[0].mxu0
        %v1125 = vpop.f32.mrb[0].mxu0
        %v1126 = vadd.f32 %v957, %v1125
        %v1127 = vpop.f32.mrb[0].mxu0
        %1128 = vmatprep.mubr.bf16.mxu0 0
        %1129 = vmatmul.mubr.bf16.gmra.mrb[0].mxu0 %v994
        %v1130 = vpop.f32.mrb[0].mxu0
        %v1131 = vadd.f32 %v957, %v1130
        %v1132 = vpop.f32.mrb[0].mxu0
        %v1133 = vpop.f32.mrb[0].mxu0
        %v1134 = vadd.f32 %v957, %v1133
        %v1135 = vpop.f32.mrb[0].mxu0
        %1136 = vmatprep.mubr.bf16.mxu0 0
        %1137 = vmatmul.mubr.bf16.gmra.mrb[0].mxu0 %v997
        %v1138 = vpop.f32.mrb[0].mxu0
        %v1139 = vadd.f32 %v957, %v1138
        %v1140 = vpop.f32.mrb[0].mxu0
        %v1141 = vpop.f32.mrb[0].mxu0
        %v1142 = vadd.f32 %v957, %v1141
        %v1143 = vpop.f32.mrb[0].mxu0
        %1144 = vmatprep.mubr.bf16.mxu0 0
        %1145 = vmatmul.mubr.bf16.gmra.mrb[0].mxu0 %v1000
        %v1146 = vpop.f32.mrb[0].mxu0
        %v1147 = vadd.f32 %v957, %v1146
        %v1148 = vpop.f32.mrb[0].mxu0
        %v1149 = vpop.f32.mrb[0].mxu0
        %v1150 = vadd.f32 %v957, %v1149
        %v1151 = vpop.f32.mrb[0].mxu0
        %1152 = vmatprep.mubr.bf16.mxu0 0
        %1153 = vmatmul.mubr.bf16.gmra.mrb[0].mxu0 %v1003
        %v1154 = vpop.f32.mrb[0].mxu0
        %v1155 = vadd.f32 %v957, %v1154
        %v1156 = vpop.f32.mrb[0].mxu0
        %v1157 = vpop.f32.mrb[0].mxu0
        %v1158 = vadd.f32 %v957, %v1157
        %v1159 = vpop.f32.mrb[0].mxu0
        %1160 = vmatprep.mubr.bf16.mxu0 0
        %1161 = vmatmul.mubr.bf16.gmra.mrb[0].mxu0 %v1006
        %v1162 = vpop.f32.mrb[0].mxu0
        %v1163 = vadd.f32 %v957, %v1162
        %v1164 = vpop.f32.mrb[0].mxu0
        %v1165 = vpop.f32.mrb[0].mxu0
        %v1166 = vadd.f32 %v957, %v1165
        %v1167 = vpop.f32.mrb[0].mxu0
        %1168 = vdwg.mxu0
        %v1169 = vpack.c.bf16 %v1046, %v1043
        %v1170 = vpack.c.bf16 %v1054, %v1051
        %v1171 = vpack.c.bf16 %v1062, %v1059
        %v1172 = vpack.c.bf16 %v1070, %v1067
        %v1173 = vpack.c.bf16 %v1078, %v1075
        %v1174 = vpack.c.bf16 %v1086, %v1083
        %v1175 = vpack.c.bf16 %v1094, %v1091
        %v1176 = vpack.c.bf16 %v1102, %v1099
        %v1177 = vpack.c.bf16 %v1110, %v1107
        %v1178 = vpack.c.bf16 %v1118, %v1115
        %v1179 = vpack.c.bf16 %v1126, %v1123
        %v1180 = vpack.c.bf16 %v1134, %v1131
        %v1181 = vpack.c.bf16 %v1142, %v1139
        %v1182 = vpack.c.bf16 %v1150, %v1147
        %v1183 = vpack.c.bf16 %v1158, %v1155
        %v1184 = vpack.c.bf16 %v1166, %v1163
        %v1185 = vld [vmem:[#allocation2] sm:$0xff]
        %v1186 = vld [vmem:[#allocation2 + $0x8] sm:$0xff]
        %v1187 = vld [vmem:[#allocation2 + $0x10] sm:$0xff]
        %v1188 = vld [vmem:[#allocation2 + $0x18] sm:$0xff]
        %v1189 = vld [vmem:[#allocation2 + $0x20] sm:$0xff]
        %v1190 = vld [vmem:[#allocation2 + $0x28] sm:$0xff]
        %v1191 = vld [vmem:[#allocation2 + $0x30] sm:$0xff]
        %v1192 = vld [vmem:[#allocation2 + $0x38] sm:$0xff]
        %v1193 = vld [vmem:[#allocation2 + $0x40] sm:$0xff]
        %v1194 = vld [vmem:[#allocation2 + $0x48] sm:$0xff]
        %v1195 = vld [vmem:[#allocation2 + $0x50] sm:$0xff]
        %v1196 = vld [vmem:[#allocation2 + $0x58] sm:$0xff]
        %v1197 = vld [vmem:[#allocation2 + $0x60] sm:$0xff]
        %v1198 = vld [vmem:[#allocation2 + $0x68] sm:$0xff]
        %v1199 = vld [vmem:[#allocation2 + $0x70] sm:$0xff]
        %v1200 = vld [vmem:[#allocation2 + $0x78] sm:$0xff]
        %vm1201 = vcmask 31744
        %v1203 = vsel %vm1201, %v1169, 0
        %v1206 = vsel %vm1201, %v1170, 0
        %v1209 = vsel %vm1201, %v1171, 0
        %v1212 = vsel %vm1201, %v1172, 0
        %v1215 = vsel %vm1201, %v1173, 0
        %v1218 = vsel %vm1201, %v1174, 0
        %v1221 = vsel %vm1201, %v1175, 0
        %v1224 = vsel %vm1201, %v1176, 0
        %v1227 = vsel %vm1201, %v1177, 0
        %v1230 = vsel %vm1201, %v1178, 0
        %v1233 = vsel %vm1201, %v1179, 0
        %v1236 = vsel %vm1201, %v1180, 0
        %v1239 = vsel %vm1201, %v1181, 0
        %v1242 = vsel %vm1201, %v1182, 0
        %v1245 = vsel %vm1201, %v1183, 0
        %v1248 = vsel %vm1201, %v1184, 0
        %v1251 = vsel %vm1201, %v1185, 0
        %v1254 = vsel %vm1201, %v1186, 0
        %v1257 = vsel %vm1201, %v1187, 0
        %v1260 = vsel %vm1201, %v1188, 0
        %v1263 = vsel %vm1201, %v1189, 0
        %v1266 = vsel %vm1201, %v1190, 0
        %v1269 = vsel %vm1201, %v1191, 0
        %v1272 = vsel %vm1201, %v1192, 0
        %v1275 = vsel %vm1201, %v1193, 0
        %v1278 = vsel %vm1201, %v1194, 0
        %v1281 = vsel %vm1201, %v1195, 0
        %v1284 = vsel %vm1201, %v1196, 0
        %v1287 = vsel %vm1201, %v1197, 0
        %v1290 = vsel %vm1201, %v1198, 0
        %v1293 = vsel %vm1201, %v1199, 0
        %v1296 = vsel %vm1201, %v1200, 0
        %1298 = vmatprep.subr.bf16.mxu0 0
        %1299 = vmatpush1.bf16.xpose.msra.mxu0 %v1251
        %1300 = vmatprep.subr.bf16.mxu0 0
        %1301 = vmatpush1.bf16.xpose.msra.mxu0 %v1254
        %1302 = vmatprep.subr.bf16.mxu0 0
        %1303 = vmatpush1.bf16.xpose.msra.mxu0 %v1257
        %1304 = vmatprep.subr.bf16.mxu0 0
        %1305 = vmatpush1.bf16.xpose.msra.mxu0 %v1260
        %1306 = vmatprep.subr.bf16.mxu0 0
        %1307 = vmatpush1.bf16.xpose.msra.mxu0 %v1263
        %1308 = vmatprep.subr.bf16.mxu0 0
        %1309 = vmatpush1.bf16.xpose.msra.mxu0 %v1266
        %1310 = vmatprep.subr.bf16.mxu0 0
        %1311 = vmatpush1.bf16.xpose.msra.mxu0 %v1269
        %1312 = vmatprep.subr.bf16.mxu0 0
        %1313 = vmatpush1.bf16.xpose.msra.mxu0 %v1272
        %1314 = vmatprep.subr.bf16.mxu0 0
        %1315 = vmatpush1.bf16.xpose.msra.mxu0 %v1275
        %1316 = vmatprep.subr.bf16.mxu0 0
        %1317 = vmatpush1.bf16.xpose.msra.mxu0 %v1278
        %1318 = vmatprep.subr.bf16.mxu0 0
        %1319 = vmatpush1.bf16.xpose.msra.mxu0 %v1281
        %1320 = vmatprep.subr.bf16.mxu0 0
        %1321 = vmatpush1.bf16.xpose.msra.mxu0 %v1284
        %1322 = vmatprep.subr.bf16.mxu0 0
        %1323 = vmatpush1.bf16.xpose.msra.mxu0 %v1287
        %1324 = vmatprep.subr.bf16.mxu0 0
        %1325 = vmatpush1.bf16.xpose.msra.mxu0 %v1290
        %1326 = vmatprep.subr.bf16.mxu0 0
        %1327 = vmatpush1.bf16.xpose.msra.mxu0 %v1293
        %1328 = vmatprep.subr.bf16.mxu0 0
        %1329 = vmatpush1.bf16.xpose.msra.mxu0 %v1296
        %1330 = vmatprep.mubr.bf16.mxu0 0
        %1331 = vmatmul.mubr.bf16.gmra.mrb[0].mxu0 %v1203
        %v1332 = vpop.f32.mrb[0].mxu0
        %v1333 = vadd.f32 0.0, %v1332
        %v1334 = vpop.f32.mrb[0].mxu0
        %v1335 = vadd.f32 0.0, %v1334
        %v1336 = vpop.f32.mrb[0].mxu0
        %v1337 = vadd.f32 0.0, %v1336
        %v1338 = vpop.f32.mrb[0].mxu0
        %v1339 = vadd.f32 0.0, %v1338
        %1340 = vmatprep.mubr.bf16.mxu0 0
        %1341 = vmatmul.mubr.bf16.gmra.mrb[0].mxu0 %v1206
        %v1342 = vpop.f32.mrb[0].mxu0
        %v1343 = vadd.f32 0.0, %v1342
        %v1344 = vpop.f32.mrb[0].mxu0
        %v1345 = vadd.f32 0.0, %v1344
        %v1346 = vpop.f32.mrb[0].mxu0
        %v1347 = vadd.f32 0.0, %v1346
        %v1348 = vpop.f32.mrb[0].mxu0
        %v1349 = vadd.f32 0.0, %v1348
        %1350 = vmatprep.mubr.bf16.mxu0 0
        %1351 = vmatmul.mubr.bf16.gmra.mrb[0].mxu0 %v1209
        %v1352 = vpop.f32.mrb[0].mxu0
        %v1353 = vadd.f32 0.0, %v1352
        %v1354 = vpop.f32.mrb[0].mxu0
        %v1355 = vadd.f32 0.0, %v1354
        %v1356 = vpop.f32.mrb[0].mxu0
        %v1357 = vadd.f32 0.0, %v1356
        %v1358 = vpop.f32.mrb[0].mxu0
        %v1359 = vadd.f32 0.0, %v1358
        %1360 = vmatprep.mubr.bf16.mxu0 0
        %1361 = vmatmul.mubr.bf16.gmra.mrb[0].mxu0 %v1212
        %v1362 = vpop.f32.mrb[0].mxu0
        %v1363 = vadd.f32 0.0, %v1362
        %v1364 = vpop.f32.mrb[0].mxu0
        %v1365 = vadd.f32 0.0, %v1364
        %v1366 = vpop.f32.mrb[0].mxu0
        %v1367 = vadd.f32 0.0, %v1366
        %v1368 = vpop.f32.mrb[0].mxu0
        %v1369 = vadd.f32 0.0, %v1368
        %1370 = vmatprep.mubr.bf16.mxu0 0
        %1371 = vmatmul.mubr.bf16.gmra.mrb[0].mxu0 %v1215
        %v1372 = vpop.f32.mrb[0].mxu0
        %v1373 = vadd.f32 0.0, %v1372
        %v1374 = vpop.f32.mrb[0].mxu0
        %v1375 = vadd.f32 0.0, %v1374
        %v1376 = vpop.f32.mrb[0].mxu0
        %v1377 = vadd.f32 0.0, %v1376
        %v1378 = vpop.f32.mrb[0].mxu0
        %v1379 = vadd.f32 0.0, %v1378
        %1380 = vmatprep.mubr.bf16.mxu0 0
        %1381 = vmatmul.mubr.bf16.gmra.mrb[0].mxu0 %v1218
        %v1382 = vpop.f32.mrb[0].mxu0
        %v1383 = vadd.f32 0.0, %v1382
        %v1384 = vpop.f32.mrb[0].mxu0
        %v1385 = vadd.f32 0.0, %v1384
        %v1386 = vpop.f32.mrb[0].mxu0
        %v1387 = vadd.f32 0.0, %v1386
        %v1388 = vpop.f32.mrb[0].mxu0
        %v1389 = vadd.f32 0.0, %v1388
        %1390 = vmatprep.mubr.bf16.mxu0 0
        %1391 = vmatmul.mubr.bf16.gmra.mrb[0].mxu0 %v1221
        %v1392 = vpop.f32.mrb[0].mxu0
        %v1393 = vadd.f32 0.0, %v1392
        %v1394 = vpop.f32.mrb[0].mxu0
        %v1395 = vadd.f32 0.0, %v1394
        %v1396 = vpop.f32.mrb[0].mxu0
        %v1397 = vadd.f32 0.0, %v1396
        %v1398 = vpop.f32.mrb[0].mxu0
        %v1399 = vadd.f32 0.0, %v1398
        %1400 = vmatprep.mubr.bf16.mxu0 0
        %1401 = vmatmul.mubr.bf16.gmra.mrb[0].mxu0 %v1224
        %v1402 = vpop.f32.mrb[0].mxu0
        %v1403 = vadd.f32 0.0, %v1402
        %v1404 = vpop.f32.mrb[0].mxu0
        %v1405 = vadd.f32 0.0, %v1404
        %v1406 = vpop.f32.mrb[0].mxu0
        %v1407 = vadd.f32 0.0, %v1406
        %v1408 = vpop.f32.mrb[0].mxu0
        %v1409 = vadd.f32 0.0, %v1408
        %1410 = vmatprep.mubr.bf16.mxu0 0
        %1411 = vmatmul.mubr.bf16.gmra.mrb[0].mxu0 %v1227
        %v1412 = vpop.f32.mrb[0].mxu0
        %v1413 = vadd.f32 0.0, %v1412
        %v1414 = vpop.f32.mrb[0].mxu0
        %v1415 = vadd.f32 0.0, %v1414
        %v1416 = vpop.f32.mrb[0].mxu0
        %v1417 = vadd.f32 0.0, %v1416
        %v1418 = vpop.f32.mrb[0].mxu0
        %v1419 = vadd.f32 0.0, %v1418
        %1420 = vmatprep.mubr.bf16.mxu0 0
        %1421 = vmatmul.mubr.bf16.gmra.mrb[0].mxu0 %v1230
        %v1422 = vpop.f32.mrb[0].mxu0
        %v1423 = vadd.f32 0.0, %v1422
        %v1424 = vpop.f32.mrb[0].mxu0
        %v1425 = vadd.f32 0.0, %v1424
        %v1426 = vpop.f32.mrb[0].mxu0
        %v1427 = vadd.f32 0.0, %v1426
        %v1428 = vpop.f32.mrb[0].mxu0
        %v1429 = vadd.f32 0.0, %v1428
        %1430 = vmatprep.mubr.bf16.mxu0 0
        %1431 = vmatmul.mubr.bf16.gmra.mrb[0].mxu0 %v1233
        %v1432 = vpop.f32.mrb[0].mxu0
        %v1433 = vadd.f32 0.0, %v1432
        %v1434 = vpop.f32.mrb[0].mxu0
        %v1435 = vadd.f32 0.0, %v1434
        %v1436 = vpop.f32.mrb[0].mxu0
        %v1437 = vadd.f32 0.0, %v1436
        %v1438 = vpop.f32.mrb[0].mxu0
        %v1439 = vadd.f32 0.0, %v1438
        %1440 = vmatprep.mubr.bf16.mxu0 0
        %1441 = vmatmul.mubr.bf16.gmra.mrb[0].mxu0 %v1236
        %v1442 = vpop.f32.mrb[0].mxu0
        %v1443 = vadd.f32 0.0, %v1442
        %v1444 = vpop.f32.mrb[0].mxu0
        %v1445 = vadd.f32 0.0, %v1444
        %v1446 = vpop.f32.mrb[0].mxu0
        %v1447 = vadd.f32 0.0, %v1446
        %v1448 = vpop.f32.mrb[0].mxu0
        %v1449 = vadd.f32 0.0, %v1448
        %1450 = vmatprep.mubr.bf16.mxu0 0
        %1451 = vmatmul.mubr.bf16.gmra.mrb[0].mxu0 %v1239
        %v1452 = vpop.f32.mrb[0].mxu0
        %v1453 = vadd.f32 0.0, %v1452
        %v1454 = vpop.f32.mrb[0].mxu0
        %v1455 = vadd.f32 0.0, %v1454
        %v1456 = vpop.f32.mrb[0].mxu0
        %v1457 = vadd.f32 0.0, %v1456
        %v1458 = vpop.f32.mrb[0].mxu0
        %v1459 = vadd.f32 0.0, %v1458
        %1460 = vmatprep.mubr.bf16.mxu0 0
        %1461 = vmatmul.mubr.bf16.gmra.mrb[0].mxu0 %v1242
        %v1462 = vpop.f32.mrb[0].mxu0
        %v1463 = vadd.f32 0.0, %v1462
        %v1464 = vpop.f32.mrb[0].mxu0
        %v1465 = vadd.f32 0.0, %v1464
        %v1466 = vpop.f32.mrb[0].mxu0
        %v1467 = vadd.f32 0.0, %v1466
        %v1468 = vpop.f32.mrb[0].mxu0
        %v1469 = vadd.f32 0.0, %v1468
        %1470 = vmatprep.mubr.bf16.mxu0 0
        %1471 = vmatmul.mubr.bf16.gmra.mrb[0].mxu0 %v1245
        %v1472 = vpop.f32.mrb[0].mxu0
        %v1473 = vadd.f32 0.0, %v1472
        %v1474 = vpop.f32.mrb[0].mxu0
        %v1475 = vadd.f32 0.0, %v1474
        %v1476 = vpop.f32.mrb[0].mxu0
        %v1477 = vadd.f32 0.0, %v1476
        %v1478 = vpop.f32.mrb[0].mxu0
        %v1479 = vadd.f32 0.0, %v1478
        %1480 = vmatprep.mubr.bf16.mxu0 0
        %1481 = vmatmul.mubr.bf16.gmra.mrb[0].mxu0 %v1248
        %v1482 = vpop.f32.mrb[0].mxu0
        %v1483 = vadd.f32 0.0, %v1482
        %v1484 = vpop.f32.mrb[0].mxu0
        %v1485 = vadd.f32 0.0, %v1484
        %v1486 = vpop.f32.mrb[0].mxu0
        %v1487 = vadd.f32 0.0, %v1486
        %v1488 = vpop.f32.mrb[0].mxu0
        %v1489 = vadd.f32 0.0, %v1488
        %1490 = vdwg.mxu0
        %v1491 = vmax.f32 %v1333, %v1335
        %1492 = vmax.xlane.f32.xlu0 %v1491
        %v1493 = vpop.xlane.xlu0 %1492
        %v1494 = vmax.f32 %v1337, %v1339
        %1495 = vmax.xlane.f32.xlu0 %v1494
        %v1496 = vpop.xlane.xlu0 %1495
        %v1497 = vmax.f32 %v1343, %v1345
        %1498 = vmax.xlane.f32.xlu0 %v1497
        %v1499 = vpop.xlane.xlu0 %1498
        %v1500 = vmax.f32 %v1347, %v1349
        %1501 = vmax.xlane.f32.xlu0 %v1500
        %v1502 = vpop.xlane.xlu0 %1501
        %v1503 = vmax.f32 %v1353, %v1355
        %1504 = vmax.xlane.f32.xlu0 %v1503
        %v1505 = vpop.xlane.xlu0 %1504
        %v1506 = vmax.f32 %v1357, %v1359
        %1507 = vmax.xlane.f32.xlu0 %v1506
        %v1508 = vpop.xlane.xlu0 %1507
        %v1509 = vmax.f32 %v1363, %v1365
        %1510 = vmax.xlane.f32.xlu0 %v1509
        %v1511 = vpop.xlane.xlu0 %1510
        %v1512 = vmax.f32 %v1367, %v1369
        %1513 = vmax.xlane.f32.xlu0 %v1512
        %v1514 = vpop.xlane.xlu0 %1513
        %v1515 = vmax.f32 %v1373, %v1375
        %1516 = vmax.xlane.f32.xlu0 %v1515
        %v1517 = vpop.xlane.xlu0 %1516
        %v1518 = vmax.f32 %v1377, %v1379
        %1519 = vmax.xlane.f32.xlu0 %v1518
        %v1520 = vpop.xlane.xlu0 %1519
        %v1521 = vmax.f32 %v1383, %v1385
        %1522 = vmax.xlane.f32.xlu0 %v1521
        %v1523 = vpop.xlane.xlu0 %1522
        %v1524 = vmax.f32 %v1387, %v1389
        %1525 = vmax.xlane.f32.xlu0 %v1524
        %v1526 = vpop.xlane.xlu0 %1525
        %v1527 = vmax.f32 %v1393, %v1395
        %1528 = vmax.xlane.f32.xlu0 %v1527
        %v1529 = vpop.xlane.xlu0 %1528
        %v1530 = vmax.f32 %v1397, %v1399
        %1531 = vmax.xlane.f32.xlu0 %v1530
        %v1532 = vpop.xlane.xlu0 %1531
        %v1533 = vmax.f32 %v1403, %v1405
        %1534 = vmax.xlane.f32.xlu0 %v1533
        %v1535 = vpop.xlane.xlu0 %1534
        %v1536 = vmax.f32 %v1407, %v1409
        %1537 = vmax.xlane.f32.xlu0 %v1536
        %v1538 = vpop.xlane.xlu0 %1537
        %v1539 = vmax.f32 %v1413, %v1415
        %1540 = vmax.xlane.f32.xlu0 %v1539
        %v1541 = vpop.xlane.xlu0 %1540
        %v1542 = vmax.f32 %v1417, %v1419
        %1543 = vmax.xlane.f32.xlu0 %v1542
        %v1544 = vpop.xlane.xlu0 %1543
        %v1545 = vmax.f32 %v1423, %v1425
        %1546 = vmax.xlane.f32.xlu0 %v1545
        %v1547 = vpop.xlane.xlu0 %1546
        %v1548 = vmax.f32 %v1427, %v1429
        %1549 = vmax.xlane.f32.xlu0 %v1548
        %v1550 = vpop.xlane.xlu0 %1549
        %v1551 = vmax.f32 %v1433, %v1435
        %1552 = vmax.xlane.f32.xlu0 %v1551
        %v1553 = vpop.xlane.xlu0 %1552
        %v1554 = vmax.f32 %v1437, %v1439
        %1555 = vmax.xlane.f32.xlu0 %v1554
        %v1556 = vpop.xlane.xlu0 %1555
        %v1557 = vmax.f32 %v1443, %v1445
        %1558 = vmax.xlane.f32.xlu0 %v1557
        %v1559 = vpop.xlane.xlu0 %1558
        %v1560 = vmax.f32 %v1447, %v1449
        %1561 = vmax.xlane.f32.xlu0 %v1560
        %v1562 = vpop.xlane.xlu0 %1561
        %v1563 = vmax.f32 %v1453, %v1455
        %1564 = vmax.xlane.f32.xlu0 %v1563
        %v1565 = vpop.xlane.xlu0 %1564
        %v1566 = vmax.f32 %v1457, %v1459
        %1567 = vmax.xlane.f32.xlu0 %v1566
        %v1568 = vpop.xlane.xlu0 %1567
        %v1569 = vmax.f32 %v1463, %v1465
        %1570 = vmax.xlane.f32.xlu0 %v1569
        %v1571 = vpop.xlane.xlu0 %1570
        %v1572 = vmax.f32 %v1467, %v1469
        %1573 = vmax.xlane.f32.xlu0 %v1572
        %v1574 = vpop.xlane.xlu0 %1573
        %v1575 = vmax.f32 %v1473, %v1475
        %1576 = vmax.xlane.f32.xlu0 %v1575
        %v1577 = vpop.xlane.xlu0 %1576
        %v1578 = vmax.f32 %v1477, %v1479
        %1579 = vmax.xlane.f32.xlu0 %v1578
        %v1580 = vpop.xlane.xlu0 %1579
        %v1581 = vmax.f32 %v1483, %v1485
        %1582 = vmax.xlane.f32.xlu0 %v1581
        %v1583 = vpop.xlane.xlu0 %1582
        %v1584 = vmax.f32 %v1487, %v1489
        %1585 = vmax.xlane.f32.xlu0 %v1584
        %v1586 = vpop.xlane.xlu0 %1585
        %v1587 = vsub.f32 %v1333, %v1493
        %v1588 = vsub.f32 %v1335, %v1493
        %v1589 = vsub.f32 %v1337, %v1496
        %v1590 = vsub.f32 %v1339, %v1496
        %v1591 = vsub.f32 %v1343, %v1499
        %v1592 = vsub.f32 %v1345, %v1499
        %v1593 = vsub.f32 %v1347, %v1502
        %v1594 = vsub.f32 %v1349, %v1502
        %v1595 = vsub.f32 %v1353, %v1505
        %v1596 = vsub.f32 %v1355, %v1505
        %v1597 = vsub.f32 %v1357, %v1508
        %v1598 = vsub.f32 %v1359, %v1508
        %v1599 = vsub.f32 %v1363, %v1511
        %v1600 = vsub.f32 %v1365, %v1511
        %v1601 = vsub.f32 %v1367, %v1514
        %v1602 = vsub.f32 %v1369, %v1514
        %v1603 = vsub.f32 %v1373, %v1517
        %v1604 = vsub.f32 %v1375, %v1517
        %v1605 = vsub.f32 %v1377, %v1520
        %v1606 = vsub.f32 %v1379, %v1520
        %v1607 = vsub.f32 %v1383, %v1523
        %v1608 = vsub.f32 %v1385, %v1523
        %v1609 = vsub.f32 %v1387, %v1526
        %v1610 = vsub.f32 %v1389, %v1526
        %v1611 = vsub.f32 %v1393, %v1529
        %v1612 = vsub.f32 %v1395, %v1529
        %v1613 = vsub.f32 %v1397, %v1532
        %v1614 = vsub.f32 %v1399, %v1532
        %v1615 = vsub.f32 %v1403, %v1535
        %v1616 = vsub.f32 %v1405, %v1535
        %v1617 = vsub.f32 %v1407, %v1538
        %v1618 = vsub.f32 %v1409, %v1538
        %v1619 = vsub.f32 %v1413, %v1541
        %v1620 = vsub.f32 %v1415, %v1541
        %v1621 = vsub.f32 %v1417, %v1544
        %v1622 = vsub.f32 %v1419, %v1544
        %v1623 = vsub.f32 %v1423, %v1547
        %v1624 = vsub.f32 %v1425, %v1547
        %v1625 = vsub.f32 %v1427, %v1550
        %v1626 = vsub.f32 %v1429, %v1550
        %v1627 = vsub.f32 %v1433, %v1553
        %v1628 = vsub.f32 %v1435, %v1553
        %v1629 = vsub.f32 %v1437, %v1556
        %v1630 = vsub.f32 %v1439, %v1556
        %v1631 = vsub.f32 %v1443, %v1559
        %v1632 = vsub.f32 %v1445, %v1559
        %v1633 = vsub.f32 %v1447, %v1562
        %v1634 = vsub.f32 %v1449, %v1562
        %v1635 = vsub.f32 %v1453, %v1565
        %v1636 = vsub.f32 %v1455, %v1565
        %v1637 = vsub.f32 %v1457, %v1568
        %v1638 = vsub.f32 %v1459, %v1568
        %v1639 = vsub.f32 %v1463, %v1571
        %v1640 = vsub.f32 %v1465, %v1571
        %v1641 = vsub.f32 %v1467, %v1574
        %v1642 = vsub.f32 %v1469, %v1574
        %v1643 = vsub.f32 %v1473, %v1577
        %v1644 = vsub.f32 %v1475, %v1577
        %v1645 = vsub.f32 %v1477, %v1580
        %v1646 = vsub.f32 %v1479, %v1580
        %v1647 = vsub.f32 %v1483, %v1583
        %v1648 = vsub.f32 %v1485, %v1583
        %v1649 = vsub.f32 %v1487, %v1586
        %v1650 = vsub.f32 %v1489, %v1586
        %v1651 = vmul.f32 %v1587, 1.442695
        %v1652 = vpow.pop %v1651
        %v1653 = vmul.f32 %v1588, 1.442695
        %v1654 = vpow.pop %v1653
        %v1655 = vmul.f32 %v1589, 1.442695
        %v1656 = vpow.pop %v1655
        %v1657 = vmul.f32 %v1590, 1.442695
        %v1658 = vpow.pop %v1657
        %v1659 = vmul.f32 %v1591, 1.442695
        %v1660 = vpow.pop %v1659
        %v1661 = vmul.f32 %v1592, 1.442695
        %v1662 = vpow.pop %v1661
        %v1663 = vmul.f32 %v1593, 1.442695
        %v1664 = vpow.pop %v1663
        %v1665 = vmul.f32 %v1594, 1.442695
        %v1666 = vpow.pop %v1665
        %v1667 = vmul.f32 %v1595, 1.442695
        %v1668 = vpow.pop %v1667
        %v1669 = vmul.f32 %v1596, 1.442695
        %v1670 = vpow.pop %v1669
        %v1671 = vmul.f32 %v1597, 1.442695
        %v1672 = vpow.pop %v1671
        %v1673 = vmul.f32 %v1598, 1.442695
        %v1674 = vpow.pop %v1673
        %v1675 = vmul.f32 %v1599, 1.442695
        %v1676 = vpow.pop %v1675
        %v1677 = vmul.f32 %v1600, 1.442695
        %v1678 = vpow.pop %v1677
        %v1679 = vmul.f32 %v1601, 1.442695
        %v1680 = vpow.pop %v1679
        %v1681 = vmul.f32 %v1602, 1.442695
        %v1682 = vpow.pop %v1681
        %v1683 = vmul.f32 %v1603, 1.442695
        %v1684 = vpow.pop %v1683
        %v1685 = vmul.f32 %v1604, 1.442695
        %v1686 = vpow.pop %v1685
        %v1687 = vmul.f32 %v1605, 1.442695
        %v1688 = vpow.pop %v1687
        %v1689 = vmul.f32 %v1606, 1.442695
        %v1690 = vpow.pop %v1689
        %v1691 = vmul.f32 %v1607, 1.442695
        %v1692 = vpow.pop %v1691
        %v1693 = vmul.f32 %v1608, 1.442695
        %v1694 = vpow.pop %v1693
        %v1695 = vmul.f32 %v1609, 1.442695
        %v1696 = vpow.pop %v1695
        %v1697 = vmul.f32 %v1610, 1.442695
        %v1698 = vpow.pop %v1697
        %v1699 = vmul.f32 %v1611, 1.442695
        %v1700 = vpow.pop %v1699
        %v1701 = vmul.f32 %v1612, 1.442695
        %v1702 = vpow.pop %v1701
        %v1703 = vmul.f32 %v1613, 1.442695
        %v1704 = vpow.pop %v1703
        %v1705 = vmul.f32 %v1614, 1.442695
        %v1706 = vpow.pop %v1705
        %v1707 = vmul.f32 %v1615, 1.442695
        %v1708 = vpow.pop %v1707
        %v1709 = vmul.f32 %v1616, 1.442695
        %v1710 = vpow.pop %v1709
        %v1711 = vmul.f32 %v1617, 1.442695
        %v1712 = vpow.pop %v1711
        %v1713 = vmul.f32 %v1618, 1.442695
        %v1714 = vpow.pop %v1713
        %v1715 = vmul.f32 %v1619, 1.442695
        %v1716 = vpow.pop %v1715
        %v1717 = vmul.f32 %v1620, 1.442695
        %v1718 = vpow.pop %v1717
        %v1719 = vmul.f32 %v1621, 1.442695
        %v1720 = vpow.pop %v1719
        %v1721 = vmul.f32 %v1622, 1.442695
        %v1722 = vpow.pop %v1721
        %v1723 = vmul.f32 %v1623, 1.442695
        %v1724 = vpow.pop %v1723
        %v1725 = vmul.f32 %v1624, 1.442695
        %v1726 = vpow.pop %v1725
        %v1727 = vmul.f32 %v1625, 1.442695
        %v1728 = vpow.pop %v1727
        %v1729 = vmul.f32 %v1626, 1.442695
        %v1730 = vpow.pop %v1729
        %v1731 = vmul.f32 %v1627, 1.442695
        %v1732 = vpow.pop %v1731
        %v1733 = vmul.f32 %v1628, 1.442695
        %v1734 = vpow.pop %v1733
        %v1735 = vmul.f32 %v1629, 1.442695
        %v1736 = vpow.pop %v1735
        %v1737 = vmul.f32 %v1630, 1.442695
        %v1738 = vpow.pop %v1737
        %v1739 = vmul.f32 %v1631, 1.442695
        %v1740 = vpow.pop %v1739
        %v1741 = vmul.f32 %v1632, 1.442695
        %v1742 = vpow.pop %v1741
        %v1743 = vmul.f32 %v1633, 1.442695
        %v1744 = vpow.pop %v1743
        %v1745 = vmul.f32 %v1634, 1.442695
        %v1746 = vpow.pop %v1745
        %v1747 = vmul.f32 %v1635, 1.442695
        %v1748 = vpow.pop %v1747
        %v1749 = vmul.f32 %v1636, 1.442695
        %v1750 = vpow.pop %v1749
        %v1751 = vmul.f32 %v1637, 1.442695
        %v1752 = vpow.pop %v1751
        %v1753 = vmul.f32 %v1638, 1.442695
        %v1754 = vpow.pop %v1753
        %v1755 = vmul.f32 %v1639, 1.442695
        %v1756 = vpow.pop %v1755
        %v1757 = vmul.f32 %v1640, 1.442695
        %v1758 = vpow.pop %v1757
        %v1759 = vmul.f32 %v1641, 1.442695
        %v1760 = vpow.pop %v1759
        %v1761 = vmul.f32 %v1642, 1.442695
        %v1762 = vpow.pop %v1761
        %v1763 = vmul.f32 %v1643, 1.442695
        %v1764 = vpow.pop %v1763
        %v1765 = vmul.f32 %v1644, 1.442695
        %v1766 = vpow.pop %v1765
        %v1767 = vmul.f32 %v1645, 1.442695
        %v1768 = vpow.pop %v1767
        %v1769 = vmul.f32 %v1646, 1.442695
        %v1770 = vpow.pop %v1769
        %v1771 = vmul.f32 %v1647, 1.442695
        %v1772 = vpow.pop %v1771
        %v1773 = vmul.f32 %v1648, 1.442695
        %v1774 = vpow.pop %v1773
        %v1775 = vmul.f32 %v1649, 1.442695
        %v1776 = vpow.pop %v1775
        %v1777 = vmul.f32 %v1650, 1.442695
        %v1778 = vpow.pop %v1777
        %v1779 = vadd.f32 %v1652, %v1654
        %1780 = vadd.xlane.f32.xlu0 %v1779
        %v1781 = vpop.xlane.xlu0 %1780
        %v1782 = vadd.f32 %v1656, %v1658
        %1783 = vadd.xlane.f32.xlu0 %v1782
        %v1784 = vpop.xlane.xlu0 %1783
        %v1785 = vadd.f32 %v1660, %v1662
        %1786 = vadd.xlane.f32.xlu0 %v1785
        %v1787 = vpop.xlane.xlu0 %1786
        %v1788 = vadd.f32 %v1664, %v1666
        %1789 = vadd.xlane.f32.xlu0 %v1788
        %v1790 = vpop.xlane.xlu0 %1789
        %v1791 = vadd.f32 %v1668, %v1670
        %1792 = vadd.xlane.f32.xlu0 %v1791
        %v1793 = vpop.xlane.xlu0 %1792
        %v1794 = vadd.f32 %v1672, %v1674
        %1795 = vadd.xlane.f32.xlu0 %v1794
        %v1796 = vpop.xlane.xlu0 %1795
        %v1797 = vadd.f32 %v1676, %v1678
        %1798 = vadd.xlane.f32.xlu0 %v1797
        %v1799 = vpop.xlane.xlu0 %1798
        %v1800 = vadd.f32 %v1680, %v1682
        %1801 = vadd.xlane.f32.xlu0 %v1800
        %v1802 = vpop.xlane.xlu0 %1801
        %v1803 = vadd.f32 %v1684, %v1686
        %1804 = vadd.xlane.f32.xlu0 %v1803
        %v1805 = vpop.xlane.xlu0 %1804
        %v1806 = vadd.f32 %v1688, %v1690
        %1807 = vadd.xlane.f32.xlu0 %v1806
        %v1808 = vpop.xlane.xlu0 %1807
        %v1809 = vadd.f32 %v1692, %v1694
        %1810 = vadd.xlane.f32.xlu0 %v1809
        %v1811 = vpop.xlane.xlu0 %1810
        %v1812 = vadd.f32 %v1696, %v1698
        %1813 = vadd.xlane.f32.xlu0 %v1812
        %v1814 = vpop.xlane.xlu0 %1813
        %v1815 = vadd.f32 %v1700, %v1702
        %1816 = vadd.xlane.f32.xlu0 %v1815
        %v1817 = vpop.xlane.xlu0 %1816
        %v1818 = vadd.f32 %v1704, %v1706
        %1819 = vadd.xlane.f32.xlu0 %v1818
        %v1820 = vpop.xlane.xlu0 %1819
        %v1821 = vadd.f32 %v1708, %v1710
        %1822 = vadd.xlane.f32.xlu0 %v1821
        %v1823 = vpop.xlane.xlu0 %1822
        %v1824 = vadd.f32 %v1712, %v1714
        %1825 = vadd.xlane.f32.xlu0 %v1824
        %v1826 = vpop.xlane.xlu0 %1825
        %v1827 = vadd.f32 %v1716, %v1718
        %1828 = vadd.xlane.f32.xlu0 %v1827
        %v1829 = vpop.xlane.xlu0 %1828
        %v1830 = vadd.f32 %v1720, %v1722
        %1831 = vadd.xlane.f32.xlu0 %v1830
        %v1832 = vpop.xlane.xlu0 %1831
        %v1833 = vadd.f32 %v1724, %v1726
        %1834 = vadd.xlane.f32.xlu0 %v1833
        %v1835 = vpop.xlane.xlu0 %1834
        %v1836 = vadd.f32 %v1728, %v1730
        %1837 = vadd.xlane.f32.xlu0 %v1836
        %v1838 = vpop.xlane.xlu0 %1837
        %v1839 = vadd.f32 %v1732, %v1734
        %1840 = vadd.xlane.f32.xlu0 %v1839
        %v1841 = vpop.xlane.xlu0 %1840
        %v1842 = vadd.f32 %v1736, %v1738
        %1843 = vadd.xlane.f32.xlu0 %v1842
        %v1844 = vpop.xlane.xlu0 %1843
        %v1845 = vadd.f32 %v1740, %v1742
        %1846 = vadd.xlane.f32.xlu0 %v1845
        %v1847 = vpop.xlane.xlu0 %1846
        %v1848 = vadd.f32 %v1744, %v1746
        %1849 = vadd.xlane.f32.xlu0 %v1848
        %v1850 = vpop.xlane.xlu0 %1849
        %v1851 = vadd.f32 %v1748, %v1750
        %1852 = vadd.xlane.f32.xlu0 %v1851
        %v1853 = vpop.xlane.xlu0 %1852
        %v1854 = vadd.f32 %v1752, %v1754
        %1855 = vadd.xlane.f32.xlu0 %v1854
        %v1856 = vpop.xlane.xlu0 %1855
        %v1857 = vadd.f32 %v1756, %v1758
        %1858 = vadd.xlane.f32.xlu0 %v1857
        %v1859 = vpop.xlane.xlu0 %1858
        %v1860 = vadd.f32 %v1760, %v1762
        %1861 = vadd.xlane.f32.xlu0 %v1860
        %v1862 = vpop.xlane.xlu0 %1861
        %v1863 = vadd.f32 %v1764, %v1766
        %1864 = vadd.xlane.f32.xlu0 %v1863
        %v1865 = vpop.xlane.xlu0 %1864
        %v1866 = vadd.f32 %v1768, %v1770
        %1867 = vadd.xlane.f32.xlu0 %v1866
        %v1868 = vpop.xlane.xlu0 %1867
        %v1869 = vadd.f32 %v1772, %v1774
        %1870 = vadd.xlane.f32.xlu0 %v1869
        %v1871 = vpop.xlane.xlu0 %1870
        %v1872 = vadd.f32 %v1776, %v1778
        %1873 = vadd.xlane.f32.xlu0 %v1872
        %v1874 = vpop.xlane.xlu0 %1873
        %v1875 = vrcp.pop %v1781
        %v1876 = vrcp.pop %v1784
        %v1877 = vrcp.pop %v1787
        %v1878 = vrcp.pop %v1790
        %v1879 = vrcp.pop %v1793
        %v1880 = vrcp.pop %v1796
        %v1881 = vrcp.pop %v1799
        %v1882 = vrcp.pop %v1802
        %v1883 = vrcp.pop %v1805
        %v1884 = vrcp.pop %v1808
        %v1885 = vrcp.pop %v1811
        %v1886 = vrcp.pop %v1814
        %v1887 = vrcp.pop %v1817
        %v1888 = vrcp.pop %v1820
        %v1889 = vrcp.pop %v1823
        %v1890 = vrcp.pop %v1826
        %v1891 = vrcp.pop %v1829
        %v1892 = vrcp.pop %v1832
        %v1893 = vrcp.pop %v1835
        %v1894 = vrcp.pop %v1838
        %v1895 = vrcp.pop %v1841
        %v1896 = vrcp.pop %v1844
        %v1897 = vrcp.pop %v1847
        %v1898 = vrcp.pop %v1850
        %v1899 = vrcp.pop %v1853
        %v1900 = vrcp.pop %v1856
        %v1901 = vrcp.pop %v1859
        %v1902 = vrcp.pop %v1862
        %v1903 = vrcp.pop %v1865
        %v1904 = vrcp.pop %v1868
        %v1905 = vrcp.pop %v1871
        %v1906 = vrcp.pop %v1874
        %v1907 = vmul.f32 %v1652, %v1875
        %v1908 = vmul.f32 %v1654, %v1875
        %v1909 = vmul.f32 %v1656, %v1876
        %v1910 = vmul.f32 %v1658, %v1876
        %v1911 = vmul.f32 %v1660, %v1877
        %v1912 = vmul.f32 %v1662, %v1877
        %v1913 = vmul.f32 %v1664, %v1878
        %v1914 = vmul.f32 %v1666, %v1878
        %v1915 = vmul.f32 %v1668, %v1879
        %v1916 = vmul.f32 %v1670, %v1879
        %v1917 = vmul.f32 %v1672, %v1880
        %v1918 = vmul.f32 %v1674, %v1880
        %v1919 = vmul.f32 %v1676, %v1881
        %v1920 = vmul.f32 %v1678, %v1881
        %v1921 = vmul.f32 %v1680, %v1882
        %v1922 = vmul.f32 %v1682, %v1882
        %v1923 = vmul.f32 %v1684, %v1883
        %v1924 = vmul.f32 %v1686, %v1883
        %v1925 = vmul.f32 %v1688, %v1884
        %v1926 = vmul.f32 %v1690, %v1884
        %v1927 = vmul.f32 %v1692, %v1885
        %v1928 = vmul.f32 %v1694, %v1885
        %v1929 = vmul.f32 %v1696, %v1886
        %v1930 = vmul.f32 %v1698, %v1886
        %v1931 = vmul.f32 %v1700, %v1887
        %v1932 = vmul.f32 %v1702, %v1887
        %v1933 = vmul.f32 %v1704, %v1888
        %v1934 = vmul.f32 %v1706, %v1888
        %v1935 = vmul.f32 %v1708, %v1889
        %v1936 = vmul.f32 %v1710, %v1889
        %v1937 = vmul.f32 %v1712, %v1890
        %v1938 = vmul.f32 %v1714, %v1890
        %v1939 = vmul.f32 %v1716, %v1891
        %v1940 = vmul.f32 %v1718, %v1891
        %v1941 = vmul.f32 %v1720, %v1892
        %v1942 = vmul.f32 %v1722, %v1892
        %v1943 = vmul.f32 %v1724, %v1893
        %v1944 = vmul.f32 %v1726, %v1893
        %v1945 = vmul.f32 %v1728, %v1894
        %v1946 = vmul.f32 %v1730, %v1894
        %v1947 = vmul.f32 %v1732, %v1895
        %v1948 = vmul.f32 %v1734, %v1895
        %v1949 = vmul.f32 %v1736, %v1896
        %v1950 = vmul.f32 %v1738, %v1896
        %v1951 = vmul.f32 %v1740, %v1897
        %v1952 = vmul.f32 %v1742, %v1897
        %v1953 = vmul.f32 %v1744, %v1898
        %v1954 = vmul.f32 %v1746, %v1898
        %v1955 = vmul.f32 %v1748, %v1899
        %v1956 = vmul.f32 %v1750, %v1899
        %v1957 = vmul.f32 %v1752, %v1900
        %v1958 = vmul.f32 %v1754, %v1900
        %v1959 = vmul.f32 %v1756, %v1901
        %v1960 = vmul.f32 %v1758, %v1901
        %v1961 = vmul.f32 %v1760, %v1902
        %v1962 = vmul.f32 %v1762, %v1902
        %v1963 = vmul.f32 %v1764, %v1903
        %v1964 = vmul.f32 %v1766, %v1903
        %v1965 = vmul.f32 %v1768, %v1904
        %v1966 = vmul.f32 %v1770, %v1904
        %v1967 = vmul.f32 %v1772, %v1905
        %v1968 = vmul.f32 %v1774, %v1905
        %v1969 = vmul.f32 %v1776, %v1906
        %v1970 = vmul.f32 %v1778, %v1906
        %v1971 = vpack.c.bf16 %v1909, %v1907
        %v1972 = vpack.c.bf16 %v1910, %v1908
        %v1973 = vpack.c.bf16 %v1913, %v1911
        %v1974 = vpack.c.bf16 %v1914, %v1912
        %v1975 = vpack.c.bf16 %v1917, %v1915
        %v1976 = vpack.c.bf16 %v1918, %v1916
        %v1977 = vpack.c.bf16 %v1921, %v1919
        %v1978 = vpack.c.bf16 %v1922, %v1920
        %v1979 = vpack.c.bf16 %v1925, %v1923
        %v1980 = vpack.c.bf16 %v1926, %v1924
        %v1981 = vpack.c.bf16 %v1929, %v1927
        %v1982 = vpack.c.bf16 %v1930, %v1928
        %v1983 = vpack.c.bf16 %v1933, %v1931
        %v1984 = vpack.c.bf16 %v1934, %v1932
        %v1985 = vpack.c.bf16 %v1937, %v1935
        %v1986 = vpack.c.bf16 %v1938, %v1936
        %v1987 = vpack.c.bf16 %v1941, %v1939
        %v1988 = vpack.c.bf16 %v1942, %v1940
        %v1989 = vpack.c.bf16 %v1945, %v1943
        %v1990 = vpack.c.bf16 %v1946, %v1944
        %v1991 = vpack.c.bf16 %v1949, %v1947
        %v1992 = vpack.c.bf16 %v1950, %v1948
        %v1993 = vpack.c.bf16 %v1953, %v1951
        %v1994 = vpack.c.bf16 %v1954, %v1952
        %v1995 = vpack.c.bf16 %v1957, %v1955
        %v1996 = vpack.c.bf16 %v1958, %v1956
        %v1997 = vpack.c.bf16 %v1961, %v1959
        %v1998 = vpack.c.bf16 %v1962, %v1960
        %v1999 = vpack.c.bf16 %v1965, %v1963
        %v2000 = vpack.c.bf16 %v1966, %v1964
        %v2001 = vpack.c.bf16 %v1969, %v1967
        %v2002 = vpack.c.bf16 %v1970, %v1968
        %v2003 = vld [vmem:[#allocation3] sm:$0xff]
        %v2004 = vld [vmem:[#allocation3 + $0x8] sm:$0xff]
        %v2005 = vld [vmem:[#allocation3 + $0x10] sm:$0xff]
        %v2006 = vld [vmem:[#allocation3 + $0x18] sm:$0xff]
        %v2007 = vld [vmem:[#allocation3 + $0x20] sm:$0xff]
        %v2008 = vld [vmem:[#allocation3 + $0x28] sm:$0xff]
        %v2009 = vld [vmem:[#allocation3 + $0x30] sm:$0xff]
        %v2010 = vld [vmem:[#allocation3 + $0x38] sm:$0xff]
        %v2011 = vld [vmem:[#allocation3 + $0x40] sm:$0xff]
        %v2012 = vld [vmem:[#allocation3 + $0x48] sm:$0xff]
        %v2013 = vld [vmem:[#allocation3 + $0x50] sm:$0xff]
        %v2014 = vld [vmem:[#allocation3 + $0x58] sm:$0xff]
        %v2015 = vld [vmem:[#allocation3 + $0x60] sm:$0xff]
        %v2016 = vld [vmem:[#allocation3 + $0x68] sm:$0xff]
        %v2017 = vld [vmem:[#allocation3 + $0x70] sm:$0xff]
        %v2018 = vld [vmem:[#allocation3 + $0x78] sm:$0xff]
        %2019 = vmatprep.subr.bf16.mxu0 0
        %2020 = vmatpush1.bf16.msra.mxu0 %v2003
        %2021 = vmatprep.subr.bf16.mxu0 0
        %2022 = vmatpush1.bf16.msra.mxu0 %v2004
        %2023 = vmatprep.subr.bf16.mxu0 0
        %2024 = vmatpush1.bf16.msra.mxu0 %v2005
        %2025 = vmatprep.subr.bf16.mxu0 0
        %2026 = vmatpush1.bf16.msra.mxu0 %v2006
        %2027 = vmatprep.subr.bf16.mxu0 0
        %2028 = vmatpush1.bf16.msra.mxu0 %v2007
        %2029 = vmatprep.subr.bf16.mxu0 0
        %2030 = vmatpush1.bf16.msra.mxu0 %v2008
        %2031 = vmatprep.subr.bf16.mxu0 0
        %2032 = vmatpush1.bf16.msra.mxu0 %v2009
        %2033 = vmatprep.subr.bf16.mxu0 0
        %2034 = vmatpush1.bf16.msra.mxu0 %v2010
        %2035 = vmatprep.subr.bf16.mxu0 0
        %2036 = vmatpush1.bf16.msra.mxu0 %v2011
        %2037 = vmatprep.subr.bf16.mxu0 0
        %2038 = vmatpush1.bf16.msra.mxu0 %v2012
        %2039 = vmatprep.subr.bf16.mxu0 0
        %2040 = vmatpush1.bf16.msra.mxu0 %v2013
        %2041 = vmatprep.subr.bf16.mxu0 0
        %2042 = vmatpush1.bf16.msra.mxu0 %v2014
        %2043 = vmatprep.subr.bf16.mxu0 0
        %2044 = vmatpush1.bf16.msra.mxu0 %v2015
        %2045 = vmatprep.subr.bf16.mxu0 0
        %2046 = vmatpush1.bf16.msra.mxu0 %v2016
        %2047 = vmatprep.subr.bf16.mxu0 0
        %2048 = vmatpush1.bf16.msra.mxu0 %v2017
        %2049 = vmatprep.subr.bf16.mxu0 0
        %2050 = vmatpush1.bf16.msra.mxu0 %v2018
        %2051 = vmatprep.mubr.bf16.mxu0 %v1972
        %2052 = vmatmul.mubr.bf16.gmra.mrb[0].mxu0 %v1971
        %v2053 = vpop.f32.mrb[0].mxu0
        %v2054 = vadd.f32 0.0, %v2053
        %v2055 = vpop.f32.mrb[0].mxu0
        %v2056 = vpop.f32.mrb[0].mxu0
        %v2057 = vadd.f32 0.0, %v2056
        %v2058 = vpop.f32.mrb[0].mxu0
        %2059 = vmatprep.mubr.bf16.mxu0 %v1974
        %2060 = vmatmul.mubr.bf16.gmra.mrb[0].mxu0 %v1973
        %v2061 = vpop.f32.mrb[0].mxu0
        %v2062 = vadd.f32 0.0, %v2061
        %v2063 = vpop.f32.mrb[0].mxu0
        %v2064 = vpop.f32.mrb[0].mxu0
        %v2065 = vadd.f32 0.0, %v2064
        %v2066 = vpop.f32.mrb[0].mxu0
        %2067 = vmatprep.mubr.bf16.mxu0 %v1976
        %2068 = vmatmul.mubr.bf16.gmra.mrb[0].mxu0 %v1975
        %v2069 = vpop.f32.mrb[0].mxu0
        %v2070 = vadd.f32 0.0, %v2069
        %v2071 = vpop.f32.mrb[0].mxu0
        %v2072 = vpop.f32.mrb[0].mxu0
        %v2073 = vadd.f32 0.0, %v2072
        %v2074 = vpop.f32.mrb[0].mxu0
        %2075 = vmatprep.mubr.bf16.mxu0 %v1978
        %2076 = vmatmul.mubr.bf16.gmra.mrb[0].mxu0 %v1977
        %v2077 = vpop.f32.mrb[0].mxu0
        %v2078 = vadd.f32 0.0, %v2077
        %v2079 = vpop.f32.mrb[0].mxu0
        %v2080 = vpop.f32.mrb[0].mxu0
        %v2081 = vadd.f32 0.0, %v2080
        %v2082 = vpop.f32.mrb[0].mxu0
        %2083 = vmatprep.mubr.bf16.mxu0 %v1980
        %2084 = vmatmul.mubr.bf16.gmra.mrb[0].mxu0 %v1979
        %v2085 = vpop.f32.mrb[0].mxu0
        %v2086 = vadd.f32 0.0, %v2085
        %v2087 = vpop.f32.mrb[0].mxu0
        %v2088 = vpop.f32.mrb[0].mxu0
        %v2089 = vadd.f32 0.0, %v2088
        %v2090 = vpop.f32.mrb[0].mxu0
        %2091 = vmatprep.mubr.bf16.mxu0 %v1982
        %2092 = vmatmul.mubr.bf16.gmra.mrb[0].mxu0 %v1981
        %v2093 = vpop.f32.mrb[0].mxu0
        %v2094 = vadd.f32 0.0, %v2093
        %v2095 = vpop.f32.mrb[0].mxu0
        %v2096 = vpop.f32.mrb[0].mxu0
        %v2097 = vadd.f32 0.0, %v2096
        %v2098 = vpop.f32.mrb[0].mxu0
        %2099 = vmatprep.mubr.bf16.mxu0 %v1984
        %2100 = vmatmul.mubr.bf16.gmra.mrb[0].mxu0 %v1983
        %v2101 = vpop.f32.mrb[0].mxu0
        %v2102 = vadd.f32 0.0, %v2101
        %v2103 = vpop.f32.mrb[0].mxu0
        %v2104 = vpop.f32.mrb[0].mxu0
        %v2105 = vadd.f32 0.0, %v2104
        %v2106 = vpop.f32.mrb[0].mxu0
        %2107 = vmatprep.mubr.bf16.mxu0 %v1986
        %2108 = vmatmul.mubr.bf16.gmra.mrb[0].mxu0 %v1985
        %v2109 = vpop.f32.mrb[0].mxu0
        %v2110 = vadd.f32 0.0, %v2109
        %v2111 = vpop.f32.mrb[0].mxu0
        %v2112 = vpop.f32.mrb[0].mxu0
        %v2113 = vadd.f32 0.0, %v2112
        %v2114 = vpop.f32.mrb[0].mxu0
        %2115 = vmatprep.mubr.bf16.mxu0 %v1988
        %2116 = vmatmul.mubr.bf16.gmra.mrb[0].mxu0 %v1987
        %v2117 = vpop.f32.mrb[0].mxu0
        %v2118 = vadd.f32 0.0, %v2117
        %v2119 = vpop.f32.mrb[0].mxu0
        %v2120 = vpop.f32.mrb[0].mxu0
        %v2121 = vadd.f32 0.0, %v2120
        %v2122 = vpop.f32.mrb[0].mxu0
        %2123 = vmatprep.mubr.bf16.mxu0 %v1990
        %2124 = vmatmul.mubr.bf16.gmra.mrb[0].mxu0 %v1989
        %v2125 = vpop.f32.mrb[0].mxu0
        %v2126 = vadd.f32 0.0, %v2125
        %v2127 = vpop.f32.mrb[0].mxu0
        %v2128 = vpop.f32.mrb[0].mxu0
        %v2129 = vadd.f32 0.0, %v2128
        %v2130 = vpop.f32.mrb[0].mxu0
        %2131 = vmatprep.mubr.bf16.mxu0 %v1992
        %2132 = vmatmul.mubr.bf16.gmra.mrb[0].mxu0 %v1991
        %v2133 = vpop.f32.mrb[0].mxu0
        %v2134 = vadd.f32 0.0, %v2133
        %v2135 = vpop.f32.mrb[0].mxu0
        %v2136 = vpop.f32.mrb[0].mxu0
        %v2137 = vadd.f32 0.0, %v2136
        %v2138 = vpop.f32.mrb[0].mxu0
        %2139 = vmatprep.mubr.bf16.mxu0 %v1994
        %2140 = vmatmul.mubr.bf16.gmra.mrb[0].mxu0 %v1993
        %v2141 = vpop.f32.mrb[0].mxu0
        %v2142 = vadd.f32 0.0, %v2141
        %v2143 = vpop.f32.mrb[0].mxu0
        %v2144 = vpop.f32.mrb[0].mxu0
        %v2145 = vadd.f32 0.0, %v2144
        %v2146 = vpop.f32.mrb[0].mxu0
        %2147 = vmatprep.mubr.bf16.mxu0 %v1996
        %2148 = vmatmul.mubr.bf16.gmra.mrb[0].mxu0 %v1995
        %v2149 = vpop.f32.mrb[0].mxu0
        %v2150 = vadd.f32 0.0, %v2149
        %v2151 = vpop.f32.mrb[0].mxu0
        %v2152 = vpop.f32.mrb[0].mxu0
        %v2153 = vadd.f32 0.0, %v2152
        %v2154 = vpop.f32.mrb[0].mxu0
        %2155 = vmatprep.mubr.bf16.mxu0 %v1998
        %2156 = vmatmul.mubr.bf16.gmra.mrb[0].mxu0 %v1997
        %v2157 = vpop.f32.mrb[0].mxu0
        %v2158 = vadd.f32 0.0, %v2157
        %v2159 = vpop.f32.mrb[0].mxu0
        %v2160 = vpop.f32.mrb[0].mxu0
        %v2161 = vadd.f32 0.0, %v2160
        %v2162 = vpop.f32.mrb[0].mxu0
        %2163 = vmatprep.mubr.bf16.mxu0 %v2000
        %2164 = vmatmul.mubr.bf16.gmra.mrb[0].mxu0 %v1999
        %v2165 = vpop.f32.mrb[0].mxu0
        %v2166 = vadd.f32 0.0, %v2165
        %v2167 = vpop.f32.mrb[0].mxu0
        %v2168 = vpop.f32.mrb[0].mxu0
        %v2169 = vadd.f32 0.0, %v2168
        %v2170 = vpop.f32.mrb[0].mxu0
        %2171 = vmatprep.mubr.bf16.mxu0 %v2002
        %2172 = vmatmul.mubr.bf16.gmra.mrb[0].mxu0 %v2001
        %v2173 = vpop.f32.mrb[0].mxu0
        %v2174 = vadd.f32 0.0, %v2173
        %v2175 = vpop.f32.mrb[0].mxu0
        %v2176 = vpop.f32.mrb[0].mxu0
        %v2177 = vadd.f32 0.0, %v2176
        %v2178 = vpop.f32.mrb[0].mxu0
        %2179 = vdwg.mxu0
        %s2180 = sld [smem:[#allocation4]]
        %v2181 = vstv %s2180
        %v2182 = vmul.f32 %v2181, %v2054
        %v2183 = vmul.f32 %v2181, %v2057
        %v2184 = vmul.f32 %v2181, %v2062
        %v2185 = vmul.f32 %v2181, %v2065
        %v2186 = vmul.f32 %v2181, %v2070
        %v2187 = vmul.f32 %v2181, %v2073
        %v2188 = vmul.f32 %v2181, %v2078
        %v2189 = vmul.f32 %v2181, %v2081
        %v2190 = vmul.f32 %v2181, %v2086
        %v2191 = vmul.f32 %v2181, %v2089
        %v2192 = vmul.f32 %v2181, %v2094
        %v2193 = vmul.f32 %v2181, %v2097
        %v2194 = vmul.f32 %v2181, %v2102
        %v2195 = vmul.f32 %v2181, %v2105
        %v2196 = vmul.f32 %v2181, %v2110
        %v2197 = vmul.f32 %v2181, %v2113
        %v2198 = vmul.f32 %v2181, %v2118
        %v2199 = vmul.f32 %v2181, %v2121
        %v2200 = vmul.f32 %v2181, %v2126
        %v2201 = vmul.f32 %v2181, %v2129
        %v2202 = vmul.f32 %v2181, %v2134
        %v2203 = vmul.f32 %v2181, %v2137
        %v2204 = vmul.f32 %v2181, %v2142
        %v2205 = vmul.f32 %v2181, %v2145
        %v2206 = vmul.f32 %v2181, %v2150
        %v2207 = vmul.f32 %v2181, %v2153
        %v2208 = vmul.f32 %v2181, %v2158
        %v2209 = vmul.f32 %v2181, %v2161
        %v2210 = vmul.f32 %v2181, %v2166
        %v2211 = vmul.f32 %v2181, %v2169
        %v2212 = vmul.f32 %v2181, %v2174
        %v2213 = vmul.f32 %v2181, %v2177
        %v2214 = vadd.f32 %v2182, %v898
        %v2215 = vadd.f32 %v2183, %v899
        %v2216 = vadd.f32 %v2184, %v900
        %v2217 = vadd.f32 %v2185, %v901
        %v2218 = vadd.f32 %v2186, %v902
        %v2219 = vadd.f32 %v2187, %v903
        %v2220 = vadd.f32 %v2188, %v904
        %v2221 = vadd.f32 %v2189, %v905
        %v2222 = vadd.f32 %v2190, %v906
        %v2223 = vadd.f32 %v2191, %v907
        %v2224 = vadd.f32 %v2192, %v908
        %v2225 = vadd.f32 %v2193, %v909
        %v2226 = vadd.f32 %v2194, %v910
        %v2227 = vadd.f32 %v2195, %v911
        %v2228 = vadd.f32 %v2196, %v912
        %v2229 = vadd.f32 %v2197, %v913
        %v2230 = vadd.f32 %v2198, %v914
        %v2231 = vadd.f32 %v2199, %v915
        %v2232 = vadd.f32 %v2200, %v916
        %v2233 = vadd.f32 %v2201, %v917
        %v2234 = vadd.f32 %v2202, %v918
        %v2235 = vadd.f32 %v2203, %v919
        %v2236 = vadd.f32 %v2204, %v920
        %v2237 = vadd.f32 %v2205, %v921
        %v2238 = vadd.f32 %v2206, %v922
        %v2239 = vadd.f32 %v2207, %v923
        %v2240 = vadd.f32 %v2208, %v924
        %v2241 = vadd.f32 %v2209, %v925
        %v2242 = vadd.f32 %v2210, %v926
        %v2243 = vadd.f32 %v2211, %v927
        %v2244 = vadd.f32 %v2212, %v928
        %v2245 = vadd.f32 %v2213, %v929
        %2246 = vst.msk [vmem:[%s371] sm:$0xff] %vm959, %v2214
        %2247 = vst.msk [vmem:[%s371 + $0x8] sm:$0xff] %vm959, %v2215
        %2248 = vst.msk [vmem:[%s371 + $0x10] sm:$0xff] %vm959, %v2216
        %2249 = vst.msk [vmem:[%s371 + $0x18] sm:$0xff] %vm959, %v2217
        %2250 = vst.msk [vmem:[%s371 + $0x20] sm:$0xff] %vm959, %v2218
        %2251 = vst.msk [vmem:[%s371 + $0x28] sm:$0xff] %vm959, %v2219
        %2252 = vst.msk [vmem:[%s371 + $0x30] sm:$0xff] %vm959, %v2220
        %2253 = vst.msk [vmem:[%s371 + $0x38] sm:$0xff] %vm959, %v2221
        %2254 = vst.msk [vmem:[%s371 + $0x40] sm:$0xff] %vm959, %v2222
        %2255 = vst.msk [vmem:[%s371 + $0x48] sm:$0xff] %vm959, %v2223
        %2256 = vst.msk [vmem:[%s371 + $0x50] sm:$0xff] %vm959, %v2224
        %2257 = vst.msk [vmem:[%s371 + $0x58] sm:$0xff] %vm959, %v2225
        %2258 = vst.msk [vmem:[%s371 + $0x60] sm:$0xff] %vm959, %v2226
        %2259 = vst.msk [vmem:[%s371 + $0x68] sm:$0xff] %vm959, %v2227
        %2260 = vst.msk [vmem:[%s371 + $0x70] sm:$0xff] %vm959, %v2228
        %2261 = vst.msk [vmem:[%s371 + $0x78] sm:$0xff] %vm959, %v2229
        %2262 = vst.msk [vmem:[%s371 + $0x80] sm:$0xff] %vm959, %v2230
        %2263 = vst.msk [vmem:[%s371 + $0x88] sm:$0xff] %vm959, %v2231
        %2264 = vst.msk [vmem:[%s371 + $0x90] sm:$0xff] %vm959, %v2232
        %2265 = vst.msk [vmem:[%s371 + $0x98] sm:$0xff] %vm959, %v2233
        %2266 = vst.msk [vmem:[%s371 + $0xa0] sm:$0xff] %vm959, %v2234
        %2267 = vst.msk [vmem:[%s371 + $0xa8] sm:$0xff] %vm959, %v2235
        %2268 = vst.msk [vmem:[%s371 + $0xb0] sm:$0xff] %vm959, %v2236
        %2269 = vst.msk [vmem:[%s371 + $0xb8] sm:$0xff] %vm959, %v2237
        %2270 = vst.msk [vmem:[%s371 + $0xc0] sm:$0xff] %vm959, %v2238
        %2271 = vst.msk [vmem:[%s371 + $0xc8] sm:$0xff] %vm959, %v2239
        %2272 = vst.msk [vmem:[%s371 + $0xd0] sm:$0xff] %vm959, %v2240
        %2273 = vst.msk [vmem:[%s371 + $0xd8] sm:$0xff] %vm959, %v2241
        %2274 = vst.msk [vmem:[%s371 + $0xe0] sm:$0xff] %vm959, %v2242
        %2275 = vst.msk [vmem:[%s371 + $0xe8] sm:$0xff] %vm959, %v2243
        %2276 = vst.msk [vmem:[%s371 + $0xf0] sm:$0xff] %vm959, %v2244
        %2277 = vst.msk [vmem:[%s371 + $0xf8] sm:$0xff] %vm959, %v2245
        %2278 = vst [vmem:[%s378] sm:$0xff] %v1907
        %2279 = vst [vmem:[%s378 + $0x8] sm:$0xff] %v1908
        %2280 = vst [vmem:[%s378 + $0x10] sm:$0xff] %v1909
        %2281 = vst [vmem:[%s378 + $0x18] sm:$0xff] %v1910
        %2282 = vst [vmem:[%s378 + $0x20] sm:$0xff] %v1911
        %2283 = vst [vmem:[%s378 + $0x28] sm:$0xff] %v1912
        %2284 = vst [vmem:[%s378 + $0x30] sm:$0xff] %v1913
        %2285 = vst [vmem:[%s378 + $0x38] sm:$0xff] %v1914
        %2286 = vst [vmem:[%s378 + $0x40] sm:$0xff] %v1915
        %2287 = vst [vmem:[%s378 + $0x48] sm:$0xff] %v1916
        %2288 = vst [vmem:[%s378 + $0x50] sm:$0xff] %v1917
        %2289 = vst [vmem:[%s378 + $0x58] sm:$0xff] %v1918
        %2290 = vst [vmem:[%s378 + $0x60] sm:$0xff] %v1919
        %2291 = vst [vmem:[%s378 + $0x68] sm:$0xff] %v1920
        %2292 = vst [vmem:[%s378 + $0x70] sm:$0xff] %v1921
        %2293 = vst [vmem:[%s378 + $0x78] sm:$0xff] %v1922
        %2294 = vst [vmem:[%s378 + $0x80] sm:$0xff] %v1923
        %2295 = vst [vmem:[%s378 + $0x88] sm:$0xff] %v1924
        %2296 = vst [vmem:[%s378 + $0x90] sm:$0xff] %v1925
        %2297 = vst [vmem:[%s378 + $0x98] sm:$0xff] %v1926
        %2298 = vst [vmem:[%s378 + $0xa0] sm:$0xff] %v1927
        %2299 = vst [vmem:[%s378 + $0xa8] sm:$0xff] %v1928
        %2300 = vst [vmem:[%s378 + $0xb0] sm:$0xff] %v1929
        %2301 = vst [vmem:[%s378 + $0xb8] sm:$0xff] %v1930
        %2302 = vst [vmem:[%s378 + $0xc0] sm:$0xff] %v1931
        %2303 = vst [vmem:[%s378 + $0xc8] sm:$0xff] %v1932
        %2304 = vst [vmem:[%s378 + $0xd0] sm:$0xff] %v1933
        %2305 = vst [vmem:[%s378 + $0xd8] sm:$0xff] %v1934
        %2306 = vst [vmem:[%s378 + $0xe0] sm:$0xff] %v1935
        %2307 = vst [vmem:[%s378 + $0xe8] sm:$0xff] %v1936
        %2308 = vst [vmem:[%s378 + $0xf0] sm:$0xff] %v1937
        %2309 = vst [vmem:[%s378 + $0xf8] sm:$0xff] %v1938
        %2310 = vst [vmem:[%s378 + $0x100] sm:$0xff] %v1939
        %2311 = vst [vmem:[%s378 + $0x108] sm:$0xff] %v1940
        %2312 = vst [vmem:[%s378 + $0x110] sm:$0xff] %v1941
        %2313 = vst [vmem:[%s378 + $0x118] sm:$0xff] %v1942
        %2314 = vst [vmem:[%s378 + $0x120] sm:$0xff] %v1943
        %2315 = vst [vmem:[%s378 + $0x128] sm:$0xff] %v1944
        %2316 = vst [vmem:[%s378 + $0x130] sm:$0xff] %v1945
        %2317 = vst [vmem:[%s378 + $0x138] sm:$0xff] %v1946
        %2318 = vst [vmem:[%s378 + $0x140] sm:$0xff] %v1947
        %2319 = vst [vmem:[%s378 + $0x148] sm:$0xff] %v1948
        %2320 = vst [vmem:[%s378 + $0x150] sm:$0xff] %v1949
        %2321 = vst [vmem:[%s378 + $0x158] sm:$0xff] %v1950
        %2322 = vst [vmem:[%s378 + $0x160] sm:$0xff] %v1951
        %2323 = vst [vmem:[%s378 + $0x168] sm:$0xff] %v1952
        %2324 = vst [vmem:[%s378 + $0x170] sm:$0xff] %v1953
        %2325 = vst [vmem:[%s378 + $0x178] sm:$0xff] %v1954
        %2326 = vst [vmem:[%s378 + $0x180] sm:$0xff] %v1955
        %2327 = vst [vmem:[%s378 + $0x188] sm:$0xff] %v1956
        %2328 = vst [vmem:[%s378 + $0x190] sm:$0xff] %v1957
        %2329 = vst [vmem:[%s378 + $0x198] sm:$0xff] %v1958
        %2330 = vst [vmem:[%s378 + $0x1a0] sm:$0xff] %v1959
        %2331 = vst [vmem:[%s378 + $0x1a8] sm:$0xff] %v1960
        %2332 = vst [vmem:[%s378 + $0x1b0] sm:$0xff] %v1961
        %2333 = vst [vmem:[%s378 + $0x1b8] sm:$0xff] %v1962
        %2334 = vst [vmem:[%s378 + $0x1c0] sm:$0xff] %v1963
        %2335 = vst [vmem:[%s378 + $0x1c8] sm:$0xff] %v1964
        %2336 = vst [vmem:[%s378 + $0x1d0] sm:$0xff] %v1965
        %2337 = vst [vmem:[%s378 + $0x1d8] sm:$0xff] %v1966
        %2338 = vst [vmem:[%s378 + $0x1e0] sm:$0xff] %v1967
        %2339 = vst [vmem:[%s378 + $0x1e8] sm:$0xff] %v1968
        %2340 = vst [vmem:[%s378 + $0x1f0] sm:$0xff] %v1969
        %2341 = vst [vmem:[%s378 + $0x1f8] sm:$0xff] %v1970
        %s2342 = sand.u32 %s226, 1
        %s2343 = scalar_lea.sflag [#allocation7], %s2342
        %s2344 = sand.u32 %s226, 1
        %s2345 = smul.addr %s2344, 256
        %s2346 = scalar_lea.vmem [#allocation8], %s2345
        %s2347 = sand.u32 %s254, 1
        %s2348 = scalar_lea.sflag [#allocation10], %s2347
        %s2349 = sand.u32 %s254, 1
        %s2350 = smul.addr %s2349, 512
        %s2351 = scalar_lea.vmem [#allocation9], %s2350
        // Predicated region
        $region61: #{self_attn_forward.1} parent=51 // pred_check
          %p2352 = pneg %p236
        $region62: #{self_attn_forward.1} parent=51 // pred_check_branch
          %2354 = sbr.rel (%p2352) target = $region64
        $region63: #{self_attn_forward.1} parent=51 // pred_region
          %s2355 = smul.u32 32, %s36
          %s2357 = ssub.s32 4096, 4096
          %2358 = vsyncadd %s2343, %s2357
          %s2359 = smul.addr %s35, 32
          %s2360 = sadd.s32 %s2355, %s2359
          %s2361 = smul.addr %s2360, 128
          %s2362 = scalar_lea.hbm %s8, %s2361
          %s2363 = sshll.u32 %s2346, 4
          %s2364 = int_to_ptr.vmem [resolvable:$true] %s2363
          %2369 = dma.vmem_to_hbm [thread:$0]  %s2364, 4096, %s2362, %s2343, 128, 128, 8
        $region64: #{self_attn_forward.1} parent=51 // pred_fallthru
          _
        // Predicated region
        $region65: #{self_attn_forward.1} parent=51 // pred_check
          %p2370 = pneg %p264
        $region66: #{self_attn_forward.1} parent=51 // pred_check_branch
          %2372 = sbr.rel (%p2370) target = $region68
        $region67: #{self_attn_forward.1} parent=51 // pred_region
          %s2373 = smul.u32 32, %s36
          %s2375 = ssub.s32 8192, 8192
          %2376 = vsyncadd %s2348, %s2375
          %s2377 = smul.addr %s2373, 2
          %s2378 = smul.addr %s35, 64
          %s2379 = sadd.s32 %s2377, %s2378
          %s2380 = smul.addr %s2379, 128
          %s2381 = scalar_lea.hbm %s9, %s2380
          %s2382 = sshll.u32 %s2351, 4
          %s2383 = int_to_ptr.vmem [resolvable:$true] %s2382
          %2388 = dma.vmem_to_hbm [thread:$0]  %s2383, 8192, %s2381, %s2348, 256, 256, 16
        $region68: #{self_attn_forward.1} parent=51 // pred_fallthru
          _
      $region52: #{self_attn_forward.1} parent=5 // pred_fallthru
        _
      %p2389 = scmp.le.s32.totalorder 2, %s26
      // Predicated region
      $region69: #{self_attn_forward.1} parent=5 // pred_check
        %p2390 = pneg %p2389
      $region70: #{self_attn_forward.1} parent=5 // pred_check_branch
        %2392 = sbr.rel (%p2390) target = $region72
      $region71: #{self_attn_forward.1} parent=5 // pred_region
        %s2393 = ssub.s32 %s26, 2
        // Predicated region
        $region73: #{self_attn_forward.1} parent=71 // pred_check
          %p2394 = pneg %p242
        $region74: #{self_attn_forward.1} parent=71 // pred_check_branch
          %2396 = sbr.rel (%p2394) target = $region76
        $region75: #{self_attn_forward.1} parent=71 // pred_region
          %s2397 = sand.u32 %s227, 1
          %s2398 = scalar_lea.sflag [#allocation7], %s2397
          %s2399 = sand.u32 %s227, 1
          %s2400 = smul.addr %s2399, 256
          %s2401 = scalar_lea.vmem [#allocation8], %s2400
          %2402 = dma.done %s2398, 4096
        $region76: #{self_attn_forward.1} parent=71 // pred_fallthru
          _
        // Predicated region
        $region77: #{self_attn_forward.1} parent=71 // pred_check
          %p2403 = pneg %p270
        $region78: #{self_attn_forward.1} parent=71 // pred_check_branch
          %2405 = sbr.rel (%p2403) target = $region80
        $region79: #{self_attn_forward.1} parent=71 // pred_region
          %s2406 = sand.u32 %s255, 1
          %s2407 = scalar_lea.sflag [#allocation10], %s2406
          %s2408 = sand.u32 %s255, 1
          %s2409 = smul.addr %s2408, 512
          %s2410 = scalar_lea.vmem [#allocation9], %s2409
          %2411 = dma.done %s2407, 8192
        $region80: #{self_attn_forward.1} parent=71 // pred_fallthru
          _
      $region72: #{self_attn_forward.1} parent=5 // pred_fallthru
        _
    $region6: #{self_attn_forward.1} parent=1 // loop_footer
      %s30 = sadd.s32 1, %s26
    $region7: #{self_attn_forward.1} parent=1 // loop_footer_branch
      %25 = sbr.rel target = $region3
    $region8: #{self_attn_forward.1} parent=1 // loop_exit
      _
    %2412 = vsyncpa [#allocation6], 1
    %s2413 = scalar_lea.sflag [#allocation6], 1
    %2414 = vsyncpa %s2413, 1
    %2415 = vsyncpa [#allocation7], 1
    %s2416 = scalar_lea.sflag [#allocation7], 1
    %2417 = vsyncpa %s2416, 1
    %2418 = vsyncpa [#allocation10], 1
    %s2419 = scalar_lea.sflag [#allocation10], 1
    %2420 = vsyncpa %s2419, 1

</llo_original>
